<compile_context>
chip_gen: v5e
topology: v5e:2x2
jax: 0.10.0
libtpu: 0.0.40
codegen_flags: <defaults>
</compile_context>

<pallas_src>
import functools

import jax
import jax.numpy as jnp
from jax.experimental import pallas as pl
from jax.experimental.pallas import tpu as pltpu


def fire_kernel(x_ref, wsq_ref, bsq_ref, wtaps_ref, bcomb_ref, o_ref, hpad_ref,
                *, hb_max):
    # x_ref:     (nB, H, W, Cin)           compute dtype (bf16 or f32)
    # wsq_ref:   (Cin, Csq)                compute dtype
    # bsq_ref:   (1, Csq)                  f32 (BN-folded bias)
    # wtaps_ref: (9, Csq, 2*Co2)           compute dtype (fused e1 + 3x3 taps)
    # bcomb_ref: (1, 2*Co2)                f32 ([be1 | be3])
    # o_ref:     (nB, H, W, 2*Co2)         f32
    # hpad_ref:  (nB, H+2, W, Csq) VMEM    f32 (H-only zero halo)
    nB, H, W, Cin = x_ref.shape
    Csq = wsq_ref.shape[1]
    Cout = wtaps_ref.shape[2]
    cd = wsq_ref.dtype                      # MXU operand dtype

    # Zero the scratch (and its H halo) once; only rows 1..H are rewritten.
    @pl.when(pl.program_id(0) == 0)
    def _():
        hpad_ref[...] = jnp.zeros_like(hpad_ref)

    # ---- squeeze 1x1 conv + folded BN + ReLU (f32 accumulate & elementwise) ----
    x2d = x_ref[...].reshape(nB * H * W, Cin)
    s = jnp.dot(x2d, wsq_ref[...], preferred_element_type=jnp.float32)
    s = jnp.maximum(s + bsq_ref[...], 0.0)                 # (M, Csq), f32
    hpad_ref[:, 1:H + 1] = s.reshape(nB, H, W, Csq)        # leading-dim store

    # Column index for masking the wrapped column after the W-roll (hoisted).
    col = jax.lax.broadcasted_iota(jnp.int32, (W, 1), 0)

    # ---- fused expand_1x1 + expand_3x3 (folded BN, ReLU), row-chunked over H ----
    for h0 in range(0, H, hb_max):
        hb = min(hb_max, H - h0)
        m = nB * hb * W
        # H-halo slice along a leading (non-tiled) dim: free.
        hc = hpad_ref[:, h0:h0 + hb + 2]                   # (nB, hb+2, W, Csq)
        # dx = -1 / +1 taps: sublane roll (XLU) + zero the wrapped column.
        hl = jnp.where(col >= 1, pltpu.roll(hc, 1, axis=2), 0.0)
        hr = jnp.where(col <= W - 2, pltpu.roll(hc, W - 1, axis=2), 0.0)
        shifted = (hl.astype(cd), hc.astype(cd), hr.astype(cd))

        # Single chained f32 accumulator over all 9 taps (MRB-friendly).
        acc = jnp.zeros((m, Cout), jnp.float32)
        for ky in range(3):
            for kx in range(3):
                p = shifted[kx][:, ky:ky + hb].reshape(m, Csq)
                acc = acc + jnp.dot(p, wtaps_ref[ky * 3 + kx],
                                    preferred_element_type=jnp.float32)

        out = jnp.maximum(acc + bcomb_ref[...], 0.0)       # [e1 | e3], f32
        o_ref[:, h0:h0 + hb] = out.reshape(nB, hb, W, Cout).astype(o_ref.dtype)


def _pick_batch_block(n, per_image_bytes, budget_bytes=8 << 20):
    """Largest sub-batch per grid step that fits the VMEM budget, keeping >=2 steps."""
    nb = max(1, min(n, int(budget_bytes) // max(int(per_image_bytes), 1)))
    if n >= 2:
        nb = min(nb, n // 2)      # keep grid length >= 2 for megacore sharding
    nb = max(nb, 1)
    while n % nb:
        nb -= 1
    return nb


def fire_block_nhwc(x_nhwc, wsq, bsq, w_taps, b_comb):
    N, H, W, Cin = x_nhwc.shape
    Csq = wsq.shape[1]
    Cout = w_taps.shape[2]

    in_itemsize = jnp.dtype(x_nhwc.dtype).itemsize
    per_img = H * W * (Cin * in_itemsize + Cout * 4) + (H + 2) * W * Csq * 4
    nB = _pick_batch_block(N, per_img)
    # Bound the live (rows, Cout) f32 accumulator to ~2048 rows per chunk.
    hb_max = max(1, min(H, 2048 // max(1, nB * W)))

    kernel = functools.partial(fire_kernel, hb_max=hb_max)
    full = lambda shape: pl.BlockSpec(shape, lambda n: (0,) * len(shape))

    return pl.pallas_call(
        kernel,
        out_shape=jax.ShapeDtypeStruct((N, H, W, Cout), jnp.float32),
        grid_spec=pltpu.PrefetchScalarGridSpec(
            num_scalar_prefetch=0,
            grid=(N // nB,),
            in_specs=[
                pl.BlockSpec((nB, H, W, Cin), lambda n: (n, 0, 0, 0)),
                full(wsq.shape),
                full(bsq.shape),
                full(w_taps.shape),
                full(b_comb.shape),
            ],
            out_specs=pl.BlockSpec((nB, H, W, Cout), lambda n: (n, 0, 0, 0)),
            scratch_shapes=[pltpu.VMEM((nB, H + 2, W, Csq), jnp.float32)],
        ),
        compiler_params=pltpu.CompilerParams(
            dimension_semantics=("parallel",),
            vmem_limit_bytes=32 * 1024 * 1024),
    )(x_nhwc, wsq, bsq, w_taps, b_comb)


def fold_bn(w, b_conv, gamma, beta, mean, var, eps=1e-5):
    """Fold eval-mode BatchNorm into conv weight (last dim = out channels) and bias."""
    scale = gamma / jnp.sqrt(var + eps)
    w_eff = w * scale
    b_eff = (b_conv - mean) * scale + beta
    return w_eff, b_eff


@functools.partial(jax.jit, static_argnames=("compute_dtype",))
def fire_block_nchw(x_nchw, params, compute_dtype=jnp.bfloat16):
    """Public entry point matching PyTorch FireBlock.forward (NCHW in / out)."""
    wsq, bsq = fold_bn(params["wsq"], params["bsq_conv"], *params["bn_sq"])
    we1, be1 = fold_bn(params["we1"], params["be1_conv"], *params["bn_e1"])
    we3, be3 = fold_bn(params["we3"], params["be3_conv"], *params["bn_e3"])

    # Fuse expand_1x1 with the 3x3 centre tap into one (Csq, 2*Co2) weight/tap.
    taps = []
    for ky in range(3):
        for kx in range(3):
            left = we1 if (ky == 1 and kx == 1) else jnp.zeros_like(we1)
            taps.append(jnp.concatenate([left, we3[ky, kx]], axis=-1))
    w_taps = jnp.stack(taps, axis=0)                       # (9, Csq, 2*Co2)
    b_comb = jnp.concatenate([be1, be3])[None, :]          # (1, 2*Co2)

    x_nhwc = jnp.transpose(x_nchw, (0, 2, 3, 1)).astype(compute_dtype)
    out_nhwc = fire_block_nhwc(
        x_nhwc,
        wsq.astype(compute_dtype),
        bsq[None, :].astype(jnp.float32),
        w_taps.astype(compute_dtype),
        b_comb.astype(jnp.float32))
    return jnp.transpose(out_nhwc, (0, 3, 1, 2))


def _reference_nchw(x_nchw, params, mxu_dtype=jnp.float32):
    """Pure-JAX reference; mxu_dtype rounds matmul operands (f32 accumulation)."""
    wsq, bsq = fold_bn(params["wsq"], params["bsq_conv"], *params["bn_sq"])
    we1, be1 = fold_bn(params["we1"], params["be1_conv"], *params["bn_e1"])
    we3, be3 = fold_bn(params["we3"], params["be3_conv"], *params["bn_e3"])
    x = jnp.transpose(x_nchw, (0, 2, 3, 1))  # NHWC

    def mm(a, w):
        return jnp.einsum("nhwc,cd->nhwd", a.astype(mxu_dtype),
                          w.astype(mxu_dtype),
                          preferred_element_type=jnp.float32)

    s = jax.nn.relu(mm(x, wsq) + bsq)
    e1 = jax.nn.relu(mm(s, we1) + be1)
    e3 = jax.lax.conv_general_dilated(
        s.astype(mxu_dtype), we3.astype(mxu_dtype), window_strides=(1, 1),
        padding="SAME", dimension_numbers=("NHWC", "HWIO", "NHWC"),
        preferred_element_type=jnp.float32)
    e3 = jax.nn.relu(e3 + be3)
    out = jnp.concatenate([e1, e3], axis=-1)
    return jnp.transpose(out, (0, 3, 1, 2))


if __name__ == "__main__":
    # Small shapes consistent with the module.
    N, Cin, H, W = 2, 4, 16, 16
    squeeze_ch = 8
    out_ch = 16
    Co2 = out_ch // 2

    key = jax.random.PRNGKey(0)
    ks = jax.random.split(key, 16)

    def bn_params(kg, kb, km, kv, c):
        gamma = 1.0 + 0.1 * jax.random.normal(kg, (c,), jnp.float32)
        beta = 0.1 * jax.random.normal(kb, (c,), jnp.float32)
        mean = 0.1 * jax.random.normal(km, (c,), jnp.float32)
        var = jnp.abs(jax.random.normal(kv, (c,), jnp.float32)) + 0.5
        return gamma, beta, mean, var

    params = {
        # conv weights stored as (Cin, Cout) / (kh, kw, Cin, Cout)
        "wsq": 0.3 * jax.random.normal(ks[0], (Cin, squeeze_ch), jnp.float32),
        "bsq_conv": 0.1 * jax.random.normal(ks[1], (squeeze_ch,), jnp.float32),
        "we1": 0.3 * jax.random.normal(ks[2], (squeeze_ch, Co2), jnp.float32),
        "be1_conv": 0.1 * jax.random.normal(ks[3], (Co2,), jnp.float32),
        "we3": 0.2 * jax.random.normal(ks[4], (3, 3, squeeze_ch, Co2),
                                       jnp.float32),
        "be3_conv": 0.1 * jax.random.normal(ks[5], (Co2,), jnp.float32),
        "bn_sq": bn_params(ks[6], ks[7], ks[8], ks[9], squeeze_ch),
        "bn_e1": bn_params(ks[10], ks[11], ks[12], ks[13], Co2),
        "bn_e3": bn_params(ks[14], ks[15], ks[6], ks[7], Co2),
    }

    x = jax.random.normal(jax.random.PRNGKey(42), (N, Cin, H, W), jnp.float32)

    # 1) Exact-math check: f32 MXU operands vs. f32 reference.
    out_f32 = jax.block_until_ready(
        fire_block_nchw(x, params, compute_dtype=jnp.float32))
    ref_f32 = _reference_nchw(x, params, mxu_dtype=jnp.float32)
    assert out_f32.shape == (N, out_ch, H, W), out_f32.shape
    assert jnp.allclose(out_f32, ref_f32, atol=1e-3, rtol=1e-3), (
        float(jnp.max(jnp.abs(out_f32 - ref_f32))))

    # 2) Fast path (default): bf16 MXU operands, f32 accumulation/elementwise,
    #    checked against a reference with identically rounded operands.
    out_bf16 = jax.block_until_ready(fire_block_nchw(x, params))
    ref_bf16 = _reference_nchw(x, params, mxu_dtype=jnp.bfloat16)
    assert out_bf16.shape == (N, out_ch, H, W), out_bf16.shape
    assert jnp.allclose(out_bf16, ref_bf16, atol=2e-2, rtol=2e-2), (
        float(jnp.max(jnp.abs(out_bf16 - ref_bf16))))

    print("KERNEL_OK")
</pallas_src>

<mosaic_0001>
module attributes {stable_mosaic.version = 11 : i64} {
  func.func @fire_kernel(%arg0: i32, %arg1: memref<1x16x16x4xf32, #tpu.memory_space<vmem>>, %arg2: memref<4x8xf32, #tpu.memory_space<vmem>>, %arg3: memref<1x8xf32, #tpu.memory_space<vmem>>, %arg4: memref<9x8x16xf32, #tpu.memory_space<vmem>>, %arg5: memref<1x16xf32, #tpu.memory_space<vmem>>, %arg6: memref<1x16x16x16xf32, #tpu.memory_space<vmem>>, %arg7: memref<1x18x16x8xf32, #tpu.memory_space<vmem>>) attributes {dimension_semantics = [#tpu.dimension_semantics<parallel>], iteration_bounds = array<i64: 2>, scalar_prefetch = 0 : i64, scratch_operands = 1 : i64, tpu.core_type = #tpu.core_type<tc>, window_params = [{transform_indices = @transform_0, window_bounds = array<i64: 1, 16, 16, 4>}, {pipeline_mode = #tpu.pipeline_mode<synchronous>, transform_indices = @transform_1, window_bounds = array<i64: 4, 8>}, {pipeline_mode = #tpu.pipeline_mode<synchronous>, transform_indices = @transform_2, window_bounds = array<i64: 1, 8>}, {pipeline_mode = #tpu.pipeline_mode<synchronous>, transform_indices = @transform_3, window_bounds = array<i64: 9, 8, 16>}, {pipeline_mode = #tpu.pipeline_mode<synchronous>, transform_indices = @transform_4, window_bounds = array<i64: 1, 16>}, {transform_indices = @transform_5, window_bounds = array<i64: 1, 16, 16, 16>}]} {
    %c0_i32 = arith.constant 0 : i32
    %0 = arith.cmpi eq, %arg0, %c0_i32 : i32
    %1 = arith.extui %0 : i1 to i32
    %c0_i32_0 = arith.constant 0 : i32
    %2 = arith.cmpi ne, %1, %c0_i32_0 : i32
    scf.if %2 {
      %cst_56 = arith.constant 0.000000e+00 : f32
      %92 = vector.broadcast %cst_56 : f32 to vector<1x18x16x8xf32>
      %c0_57 = arith.constant 0 : index
      %c0_58 = arith.constant 0 : index
      %c0_59 = arith.constant 0 : index
      %c0_60 = arith.constant 0 : index
      %93 = vector.load %arg7[%c0_57, %c0_58, %c0_59, %c0_60] : memref<1x18x16x8xf32, #tpu.memory_space<vmem>>, vector<1x18x16x8xf32>
      tpu.vector_store %arg7[%c0_57, %c0_58, %c0_59, %c0_60], %92 {strides = array<i32>} : memref<1x18x16x8xf32, #tpu.memory_space<vmem>>, vector<1x18x16x8xf32>,
    } else {
    }
    %c0 = arith.constant 0 : index
    %c0_1 = arith.constant 0 : index
    %c0_2 = arith.constant 0 : index
    %c0_3 = arith.constant 0 : index
    %3 = vector.load %arg1[%c0, %c0_1, %c0_2, %c0_3] : memref<1x16x16x4xf32, #tpu.memory_space<vmem>>, vector<1x16x16x4xf32>
    %4 = vector.shape_cast %3 : vector<1x16x16x4xf32> to vector<256x4xf32>
    %c0_4 = arith.constant 0 : index
    %c0_5 = arith.constant 0 : index
    %5 = vector.load %arg2[%c0_4, %c0_5] : memref<4x8xf32, #tpu.memory_space<vmem>>, vector<4x8xf32>
    %cst = arith.constant dense<0.000000e+00> : vector<256x8xf32>
    %6 = tpu.matmul %4, %5, %cst {dimension_numbers = #tpu.dot_dimension_numbers<[1], [0], [0], [1], [0, 0, 1, 1], [], []>} : vector<256x4xf32>, vector<4x8xf32>, vector<256x8xf32> -> vector<256x8xf32>
    %c0_6 = arith.constant 0 : index
    %c0_7 = arith.constant 0 : index
    %7 = vector.load %arg3[%c0_6, %c0_7] : memref<1x8xf32, #tpu.memory_space<vmem>>, vector<1x8xf32>
    %8 = vector.broadcast %7 : vector<1x8xf32> to vector<256x8xf32>
    %9 = arith.addf %6, %8 : vector<256x8xf32>
    %cst_8 = arith.constant 0.000000e+00 : f32
    %10 = vector.broadcast %cst_8 : f32 to vector<256x8xf32>
    %11 = arith.maximumf %9, %10 : vector<256x8xf32>
    %12 = vector.shape_cast %11 : vector<256x8xf32> to vector<1x16x16x8xf32>
    %c0_9 = arith.constant 0 : index
    %c1 = arith.constant 1 : index
    %c0_10 = arith.constant 0 : index
    %c0_11 = arith.constant 0 : index
    %13 = vector.load %arg7[%c0_9, %c1, %c0_10, %c0_11] : memref<1x18x16x8xf32, #tpu.memory_space<vmem>>, vector<1x16x16x8xf32>
    tpu.vector_store %arg7[%c0_9, %c1, %c0_10, %c0_11], %12 {strides = array<i32>} : memref<1x18x16x8xf32, #tpu.memory_space<vmem>>, vector<1x16x16x8xf32>,
    %14 = tpu.iota {dimensions = array<i32: 0>} : vector<16x1xi32>
    %c0_12 = arith.constant 0 : index
    %c0_13 = arith.constant 0 : index
    %c0_14 = arith.constant 0 : index
    %c0_15 = arith.constant 0 : index
    %15 = vector.load %arg7[%c0_12, %c0_13, %c0_14, %c0_15] : memref<1x18x16x8xf32, #tpu.memory_space<vmem>>, vector<1x18x16x8xf32>
    %c1_i32 = arith.constant 1 : i32
    %16 = vector.broadcast %c1_i32 : i32 to vector<16x1xi32>
    %17 = arith.cmpi sge, %14, %16 : vector<16x1xi32>
    %c1_i32_16 = arith.constant 1 : i32
    %18 = tpu.dynamic_rotate %15 by %c1_i32_16 dim 2 : vector<1x18x16x8xf32>, i32 -> vector<1x18x16x8xf32>
    %cst_17 = arith.constant 0.000000e+00 : f32
    %19 = vector.shape_cast %17 : vector<16x1xi1> to vector<1x1x16x1xi1>
    %20 = vector.broadcast %19 : vector<1x1x16x1xi1> to vector<1x18x16x8xi1>
    %21 = vector.broadcast %cst_17 : f32 to vector<1x18x16x8xf32>
    %22 = arith.select %20, %18, %21 : vector<1x18x16x8xi1>, vector<1x18x16x8xf32>
    %c14_i32 = arith.constant 14 : i32
    %23 = vector.broadcast %c14_i32 : i32 to vector<16x1xi32>
    %24 = arith.cmpi sle, %14, %23 : vector<16x1xi32>
    %c15_i32 = arith.constant 15 : i32
    %25 = tpu.dynamic_rotate %15 by %c15_i32 dim 2 : vector<1x18x16x8xf32>, i32 -> vector<1x18x16x8xf32>
    %cst_18 = arith.constant 0.000000e+00 : f32
    %26 = vector.shape_cast %24 : vector<16x1xi1> to vector<1x1x16x1xi1>
    %27 = vector.broadcast %26 : vector<1x1x16x1xi1> to vector<1x18x16x8xi1>
    %28 = vector.broadcast %cst_18 : f32 to vector<1x18x16x8xf32>
    %29 = arith.select %27, %25, %28 : vector<1x18x16x8xi1>, vector<1x18x16x8xf32>
    %cst_19 = arith.constant 0.000000e+00 : f32
    %30 = vector.broadcast %cst_19 : f32 to vector<256x16xf32>
    %31 = vector.extract_strided_slice %22 {offsets = [0, 0, 0, 0], sizes = [1, 16, 16, 8], strides = [1, 1, 1, 1]} : vector<1x18x16x8xf32> to vector<1x16x16x8xf32>
    %32 = vector.shape_cast %31 : vector<1x16x16x8xf32> to vector<256x8xf32>
    %c0_20 = arith.constant 0 : index
    %c0_21 = arith.constant 0 : index
    %c0_22 = arith.constant 0 : index
    %33 = vector.load %arg4[%c0_20, %c0_21, %c0_22] : memref<9x8x16xf32, #tpu.memory_space<vmem>>, vector<1x8x16xf32>
    %34 = vector.shape_cast %33 : vector<1x8x16xf32> to vector<8x16xf32>
    %cst_23 = arith.constant dense<0.000000e+00> : vector<256x16xf32>
    %35 = tpu.matmul %32, %34, %cst_23 {dimension_numbers = #tpu.dot_dimension_numbers<[1], [0], [0], [1], [0, 0, 1, 1], [], []>} : vector<256x8xf32>, vector<8x16xf32>, vector<256x16xf32> -> vector<256x16xf32>
    %36 = arith.addf %30, %35 : vector<256x16xf32>
    %37 = vector.extract_strided_slice %15 {offsets = [0, 0, 0, 0], sizes = [1, 16, 16, 8], strides = [1, 1, 1, 1]} : vector<1x18x16x8xf32> to vector<1x16x16x8xf32>
    %38 = vector.shape_cast %37 : vector<1x16x16x8xf32> to vector<256x8xf32>
    %c1_24 = arith.constant 1 : index
    %c0_25 = arith.constant 0 : index
    %c0_26 = arith.constant 0 : index
    %39 = vector.load %arg4[%c1_24, %c0_25, %c0_26] : memref<9x8x16xf32, #tpu.memory_space<vmem>>, vector<1x8x16xf32>
    %40 = vector.shape_cast %39 : vector<1x8x16xf32> to vector<8x16xf32>
    %cst_27 = arith.constant dense<0.000000e+00> : vector<256x16xf32>
    %41 = tpu.matmul %38, %40, %cst_27 {dimension_numbers = #tpu.dot_dimension_numbers<[1], [0], [0], [1], [0, 0, 1, 1], [], []>} : vector<256x8xf32>, vector<8x16xf32>, vector<256x16xf32> -> vector<256x16xf32>
    %42 = arith.addf %36, %41 : vector<256x16xf32>
    %43 = vector.extract_strided_slice %29 {offsets = [0, 0, 0, 0], sizes = [1, 16, 16, 8], strides = [1, 1, 1, 1]} : vector<1x18x16x8xf32> to vector<1x16x16x8xf32>
    %44 = vector.shape_cast %43 : vector<1x16x16x8xf32> to vector<256x8xf32>
    %c2 = arith.constant 2 : index
    %c0_28 = arith.constant 0 : index
    %c0_29 = arith.constant 0 : index
    %45 = vector.load %arg4[%c2, %c0_28, %c0_29] : memref<9x8x16xf32, #tpu.memory_space<vmem>>, vector<1x8x16xf32>
    %46 = vector.shape_cast %45 : vector<1x8x16xf32> to vector<8x16xf32>
    %cst_30 = arith.constant dense<0.000000e+00> : vector<256x16xf32>
    %47 = tpu.matmul %44, %46, %cst_30 {dimension_numbers = #tpu.dot_dimension_numbers<[1], [0], [0], [1], [0, 0, 1, 1], [], []>} : vector<256x8xf32>, vector<8x16xf32>, vector<256x16xf32> -> vector<256x16xf32>
    %48 = arith.addf %42, %47 : vector<256x16xf32>
    %49 = vector.extract_strided_slice %22 {offsets = [0, 1, 0, 0], sizes = [1, 16, 16, 8], strides = [1, 1, 1, 1]} : vector<1x18x16x8xf32> to vector<1x16x16x8xf32>
    %50 = vector.shape_cast %49 : vector<1x16x16x8xf32> to vector<256x8xf32>
    %c3 = arith.constant 3 : index
    %c0_31 = arith.constant 0 : index
    %c0_32 = arith.constant 0 : index
    %51 = vector.load %arg4[%c3, %c0_31, %c0_32] : memref<9x8x16xf32, #tpu.memory_space<vmem>>, vector<1x8x16xf32>
    %52 = vector.shape_cast %51 : vector<1x8x16xf32> to vector<8x16xf32>
    %cst_33 = arith.constant dense<0.000000e+00> : vector<256x16xf32>
    %53 = tpu.matmul %50, %52, %cst_33 {dimension_numbers = #tpu.dot_dimension_numbers<[1], [0], [0], [1], [0, 0, 1, 1], [], []>} : vector<256x8xf32>, vector<8x16xf32>, vector<256x16xf32> -> vector<256x16xf32>
    %54 = arith.addf %48, %53 : vector<256x16xf32>
    %55 = vector.extract_strided_slice %15 {offsets = [0, 1, 0, 0], sizes = [1, 16, 16, 8], strides = [1, 1, 1, 1]} : vector<1x18x16x8xf32> to vector<1x16x16x8xf32>
    %56 = vector.shape_cast %55 : vector<1x16x16x8xf32> to vector<256x8xf32>
    %c4 = arith.constant 4 : index
    %c0_34 = arith.constant 0 : index
    %c0_35 = arith.constant 0 : index
    %57 = vector.load %arg4[%c4, %c0_34, %c0_35] : memref<9x8x16xf32, #tpu.memory_space<vmem>>, vector<1x8x16xf32>
    %58 = vector.shape_cast %57 : vector<1x8x16xf32> to vector<8x16xf32>
    %cst_36 = arith.constant dense<0.000000e+00> : vector<256x16xf32>
    %59 = tpu.matmul %56, %58, %cst_36 {dimension_numbers = #tpu.dot_dimension_numbers<[1], [0], [0], [1], [0, 0, 1, 1], [], []>} : vector<256x8xf32>, vector<8x16xf32>, vector<256x16xf32> -> vector<256x16xf32>
    %60 = arith.addf %54, %59 : vector<256x16xf32>
    %61 = vector.extract_strided_slice %29 {offsets = [0, 1, 0, 0], sizes = [1, 16, 16, 8], strides = [1, 1, 1, 1]} : vector<1x18x16x8xf32> to vector<1x16x16x8xf32>
    %62 = vector.shape_cast %61 : vector<1x16x16x8xf32> to vector<256x8xf32>
    %c5 = arith.constant 5 : index
    %c0_37 = arith.constant 0 : index
    %c0_38 = arith.constant 0 : index
    %63 = vector.load %arg4[%c5, %c0_37, %c0_38] : memref<9x8x16xf32, #tpu.memory_space<vmem>>, vector<1x8x16xf32>
    %64 = vector.shape_cast %63 : vector<1x8x16xf32> to vector<8x16xf32>
    %cst_39 = arith.constant dense<0.000000e+00> : vector<256x16xf32>
    %65 = tpu.matmul %62, %64, %cst_39 {dimension_numbers = #tpu.dot_dimension_numbers<[1], [0], [0], [1], [0, 0, 1, 1], [], []>} : vector<256x8xf32>, vector<8x16xf32>, vector<256x16xf32> -> vector<256x16xf32>
    %66 = arith.addf %60, %65 : vector<256x16xf32>
    %67 = vector.extract_strided_slice %22 {offsets = [0, 2, 0, 0], sizes = [1, 16, 16, 8], strides = [1, 1, 1, 1]} : vector<1x18x16x8xf32> to vector<1x16x16x8xf32>
    %68 = vector.shape_cast %67 : vector<1x16x16x8xf32> to vector<256x8xf32>
    %c6 = arith.constant 6 : index
    %c0_40 = arith.constant 0 : index
    %c0_41 = arith.constant 0 : index
    %69 = vector.load %arg4[%c6, %c0_40, %c0_41] : memref<9x8x16xf32, #tpu.memory_space<vmem>>, vector<1x8x16xf32>
    %70 = vector.shape_cast %69 : vector<1x8x16xf32> to vector<8x16xf32>
    %cst_42 = arith.constant dense<0.000000e+00> : vector<256x16xf32>
    %71 = tpu.matmul %68, %70, %cst_42 {dimension_numbers = #tpu.dot_dimension_numbers<[1], [0], [0], [1], [0, 0, 1, 1], [], []>} : vector<256x8xf32>, vector<8x16xf32>, vector<256x16xf32> -> vector<256x16xf32>
    %72 = arith.addf %66, %71 : vector<256x16xf32>
    %73 = vector.extract_strided_slice %15 {offsets = [0, 2, 0, 0], sizes = [1, 16, 16, 8], strides = [1, 1, 1, 1]} : vector<1x18x16x8xf32> to vector<1x16x16x8xf32>
    %74 = vector.shape_cast %73 : vector<1x16x16x8xf32> to vector<256x8xf32>
    %c7 = arith.constant 7 : index
    %c0_43 = arith.constant 0 : index
    %c0_44 = arith.constant 0 : index
    %75 = vector.load %arg4[%c7, %c0_43, %c0_44] : memref<9x8x16xf32, #tpu.memory_space<vmem>>, vector<1x8x16xf32>
    %76 = vector.shape_cast %75 : vector<1x8x16xf32> to vector<8x16xf32>
    %cst_45 = arith.constant dense<0.000000e+00> : vector<256x16xf32>
    %77 = tpu.matmul %74, %76, %cst_45 {dimension_numbers = #tpu.dot_dimension_numbers<[1], [0], [0], [1], [0, 0, 1, 1], [], []>} : vector<256x8xf32>, vector<8x16xf32>, vector<256x16xf32> -> vector<256x16xf32>
    %78 = arith.addf %72, %77 : vector<256x16xf32>
    %79 = vector.extract_strided_slice %29 {offsets = [0, 2, 0, 0], sizes = [1, 16, 16, 8], strides = [1, 1, 1, 1]} : vector<1x18x16x8xf32> to vector<1x16x16x8xf32>
    %80 = vector.shape_cast %79 : vector<1x16x16x8xf32> to vector<256x8xf32>
    %c8 = arith.constant 8 : index
    %c0_46 = arith.constant 0 : index
    %c0_47 = arith.constant 0 : index
    %81 = vector.load %arg4[%c8, %c0_46, %c0_47] : memref<9x8x16xf32, #tpu.memory_space<vmem>>, vector<1x8x16xf32>
    %82 = vector.shape_cast %81 : vector<1x8x16xf32> to vector<8x16xf32>
    %cst_48 = arith.constant dense<0.000000e+00> : vector<256x16xf32>
    %83 = tpu.matmul %80, %82, %cst_48 {dimension_numbers = #tpu.dot_dimension_numbers<[1], [0], [0], [1], [0, 0, 1, 1], [], []>} : vector<256x8xf32>, vector<8x16xf32>, vector<256x16xf32> -> vector<256x16xf32>
    %84 = arith.addf %78, %83 : vector<256x16xf32>
    %c0_49 = arith.constant 0 : index
    %c0_50 = arith.constant 0 : index
    %85 = vector.load %arg5[%c0_49, %c0_50] : memref<1x16xf32, #tpu.memory_space<vmem>>, vector<1x16xf32>
    %86 = vector.broadcast %85 : vector<1x16xf32> to vector<256x16xf32>
    %87 = arith.addf %84, %86 : vector<256x16xf32>
    %cst_51 = arith.constant 0.000000e+00 : f32
    %88 = vector.broadcast %cst_51 : f32 to vector<256x16xf32>
    %89 = arith.maximumf %87, %88 : vector<256x16xf32>
    %90 = vector.shape_cast %89 : vector<256x16xf32> to vector<1x16x16x16xf32>
    %c0_52 = arith.constant 0 : index
    %c0_53 = arith.constant 0 : index
    %c0_54 = arith.constant 0 : index
    %c0_55 = arith.constant 0 : index
    %91 = vector.load %arg6[%c0_52, %c0_53, %c0_54, %c0_55] : memref<1x16x16x16xf32, #tpu.memory_space<vmem>>, vector<1x16x16x16xf32>
    tpu.vector_store %arg6[%c0_52, %c0_53, %c0_54, %c0_55], %90 {strides = array<i32>} : memref<1x16x16x16xf32, #tpu.memory_space<vmem>>, vector<1x16x16x16xf32>,
    return
  }
  func.func @transform_0(%arg0: i32) -> (i32, i32, i32, i32) {
    %c0_i32 = arith.constant 0 : i32
    %c0_i32_0 = arith.constant 0 : i32
    %c0_i32_1 = arith.constant 0 : i32
    %c0_i32_2 = arith.constant 0 : i32
    return %arg0, %c0_i32, %c0_i32_0, %c0_i32_1 : i32, i32, i32, i32
  }
  func.func @transform_1(%arg0: i32) -> (i32, i32) {
    %c0_i32 = arith.constant 0 : i32
    %c0_i32_0 = arith.constant 0 : i32
    %c0_i32_1 = arith.constant 0 : i32
    return %c0_i32, %c0_i32_0 : i32, i32
  }
  func.func @transform_2(%arg0: i32) -> (i32, i32) {
    %c0_i32 = arith.constant 0 : i32
    %c0_i32_0 = arith.constant 0 : i32
    %c0_i32_1 = arith.constant 0 : i32
    return %c0_i32, %c0_i32_0 : i32, i32
  }
  func.func @transform_3(%arg0: i32) -> (i32, i32, i32) {
    %c0_i32 = arith.constant 0 : i32
    %c0_i32_0 = arith.constant 0 : i32
    %c0_i32_1 = arith.constant 0 : i32
    %c0_i32_2 = arith.constant 0 : i32
    return %c0_i32, %c0_i32_0, %c0_i32_1 : i32, i32, i32
  }
  func.func @transform_4(%arg0: i32) -> (i32, i32) {
    %c0_i32 = arith.constant 0 : i32
    %c0_i32_0 = arith.constant 0 : i32
    %c0_i32_1 = arith.constant 0 : i32
    return %c0_i32, %c0_i32_0 : i32, i32
  }
  func.func @transform_5(%arg0: i32) -> (i32, i32, i32, i32) {
    %c0_i32 = arith.constant 0 : i32
    %c0_i32_0 = arith.constant 0 : i32
    %c0_i32_1 = arith.constant 0 : i32
    %c0_i32_2 = arith.constant 0 : i32
    return %arg0, %c0_i32, %c0_i32_0, %c0_i32_1 : i32, i32, i32, i32
  }
}

</mosaic_0001>

<llo_original>
// kernel: fire_block_nchw.1
$region0: #{fire_block_nchw.1}
  #allocation0 [shape = 'u32[]', space=smem, size = 0x4, offset = 0x4, fixed_abs, tag = 'smem constant byte address 0x4 - core index']
  #allocation1 [shape = 'u32[72,128]{1,0:T(1,128)}', space=vmem, size = 0x9000, scoped, tag = 'internal scratch']
  #allocation2 [shape = 'f32[1,18,16,8]{3,2,1,0:T(8,128)}', space=vmem, size = 0x24000, scoped, tag = 'scratch operand']
  %s0 = inlined_call_operand.vmem [shape: f32[2,16,16,4], index: 0, kind: input, shape index: {}]
  %s1 = inlined_call_operand.vmem [shape: f32[4,8], index: 1, kind: input, shape index: {}]
  %s2 = inlined_call_operand.vmem [shape: f32[1,8], index: 2, kind: input, shape index: {}]
  %s3 = inlined_call_operand.vmem [shape: f32[9,8,16], index: 3, kind: input, shape index: {}]
  %s4 = inlined_call_operand.vmem [shape: f32[1,16], index: 4, kind: input, shape index: {}]
  %s5 = inlined_call_operand.vmem [shape: f32[2,16,16,16], index: 5, kind: output, shape index: {}]
  %s6 = sld [smem:[#allocation0]]
  $region57: #{fire_block_nchw.1} parent=0
    _
  %s8 = ssub.s32 1, %s6
  %s9 = scalar_select 0, %s8, %s6
  loop: start=0, step=1, limit=4
  $region2: #{fire_block_nchw.1} parent=0 // loop_pre_header
    _
  $region3: #{fire_block_nchw.1} parent=0 // loop_header
    %s11 = sphi 0, %s15
    %p12 = scmp.ge.s32.totalorder %s11, 4
    %s21 = sphi 0, %s23
    %s24 = sphi 0, %s21
    %s25 = sphi 0, %s24
    %s41 = sphi 0, %s25
    %s45 = sphi 0, %s45
    %s47 = sphi 0, %s45
    %s48 = sphi 0, %s47
    %s62 = sphi 0, %s48
    %s66 = sphi 0, %s66
    %s68 = sphi 0, %s66
    %s69 = sphi 0, %s68
    %s83 = sphi 0, %s69
    %s87 = sphi 0, %s87
    %s89 = sphi 0, %s87
    %s90 = sphi 0, %s89
    %s104 = sphi 0, %s90
    %s108 = sphi 0, %s108
    %s110 = sphi 0, %s108
    %s111 = sphi 0, %s110
    %s125 = sphi 0, %s111
    %s131 = sphi 0, %s133
    %s134 = sphi 0, %s131
    %s135 = sphi 0, %s134
    %s151 = sphi 0, %s135
  $region4: #{fire_block_nchw.1} parent=0 // loop_header_branch
    %14 = sbr.rel (%p12) target = $region8
  $region5: #{fire_block_nchw.1} parent=0 // loop_body
    %s16 = ssub.s32 %s11, 1
    %s17 = ssub.s32 %s11, 2
    %s18 = sadd.s32 %s11, 1
    %s19 = ssub.s32 %s11, %s18
    %p20 = scmp.eq.s32.totalorder %s19, 0
    %s22 = sadd.s32 %s21, 1
    %s23 = scalar_select %p20, %s21, %s22
    %p26 = pneg %p20
    %p27 = scmp.eq.s32.totalorder %s11, 1
    %p28 = por %p26, %p27
    %p29 = scmp.ne.s32.totalorder %s21, %s24
    %p30 = scmp.eq.s32.totalorder %s11, 0
    %p31 = por %p29, %p30
    %p32 = scmp.ne.s32.totalorder %s21, %s24
    %p33 = scmp.eq.s32.totalorder %s16, 1
    %p34 = por %p32, %p33
    %p35 = scmp.ne.s32.totalorder %s24, %s25
    %p36 = scmp.eq.s32.totalorder %s16, 0
    %p37 = por %p35, %p36
    %p38 = scmp.ne.s32.totalorder %s24, %s25
    %p39 = scmp.eq.s32.totalorder %s17, 1
    %p40 = por %p38, %p39
    %p42 = scmp.ne.s32.totalorder %s25, %s41
    %p43 = scmp.eq.s32.totalorder %s17, 0
    %p44 = por %p42, %p43
    %s46 = sadd.s32 %s45, 1
    %p49 = scmp.eq.s32.totalorder %s11, 1
    %p50 = scmp.ne.s32.totalorder %s45, %s47
    %p51 = scmp.eq.s32.totalorder %s11, 0
    %p52 = por %p50, %p51
    %p53 = scmp.ne.s32.totalorder %s45, %s47
    %p54 = scmp.eq.s32.totalorder %s16, 1
    %p55 = por %p53, %p54
    %p56 = scmp.ne.s32.totalorder %s47, %s48
    %p57 = scmp.eq.s32.totalorder %s16, 0
    %p58 = por %p56, %p57
    %p59 = scmp.ne.s32.totalorder %s47, %s48
    %p60 = scmp.eq.s32.totalorder %s17, 1
    %p61 = por %p59, %p60
    %p63 = scmp.ne.s32.totalorder %s48, %s62
    %p64 = scmp.eq.s32.totalorder %s17, 0
    %p65 = por %p63, %p64
    %s67 = sadd.s32 %s66, 1
    %p70 = scmp.eq.s32.totalorder %s11, 1
    %p71 = scmp.ne.s32.totalorder %s66, %s68
    %p72 = scmp.eq.s32.totalorder %s11, 0
    %p73 = por %p71, %p72
    %p74 = scmp.ne.s32.totalorder %s66, %s68
    %p75 = scmp.eq.s32.totalorder %s16, 1
    %p76 = por %p74, %p75
    %p77 = scmp.ne.s32.totalorder %s68, %s69
    %p78 = scmp.eq.s32.totalorder %s16, 0
    %p79 = por %p77, %p78
    %p80 = scmp.ne.s32.totalorder %s68, %s69
    %p81 = scmp.eq.s32.totalorder %s17, 1
    %p82 = por %p80, %p81
    %p84 = scmp.ne.s32.totalorder %s69, %s83
    %p85 = scmp.eq.s32.totalorder %s17, 0
    %p86 = por %p84, %p85
    %s88 = sadd.s32 %s87, 1
    %p91 = scmp.eq.s32.totalorder %s11, 1
    %p92 = scmp.ne.s32.totalorder %s87, %s89
    %p93 = scmp.eq.s32.totalorder %s11, 0
    %p94 = por %p92, %p93
    %p95 = scmp.ne.s32.totalorder %s87, %s89
    %p96 = scmp.eq.s32.totalorder %s16, 1
    %p97 = por %p95, %p96
    %p98 = scmp.ne.s32.totalorder %s89, %s90
    %p99 = scmp.eq.s32.totalorder %s16, 0
    %p100 = por %p98, %p99
    %p101 = scmp.ne.s32.totalorder %s89, %s90
    %p102 = scmp.eq.s32.totalorder %s17, 1
    %p103 = por %p101, %p102
    %p105 = scmp.ne.s32.totalorder %s90, %s104
    %p106 = scmp.eq.s32.totalorder %s17, 0
    %p107 = por %p105, %p106
    %s109 = sadd.s32 %s108, 1
    %p112 = scmp.eq.s32.totalorder %s11, 1
    %p113 = scmp.ne.s32.totalorder %s108, %s110
    %p114 = scmp.eq.s32.totalorder %s11, 0
    %p115 = por %p113, %p114
    %p116 = scmp.ne.s32.totalorder %s108, %s110
    %p117 = scmp.eq.s32.totalorder %s16, 1
    %p118 = por %p116, %p117
    %p119 = scmp.ne.s32.totalorder %s110, %s111
    %p120 = scmp.eq.s32.totalorder %s16, 0
    %p121 = por %p119, %p120
    %p122 = scmp.ne.s32.totalorder %s110, %s111
    %p123 = scmp.eq.s32.totalorder %s17, 1
    %p124 = por %p122, %p123
    %p126 = scmp.ne.s32.totalorder %s111, %s125
    %p127 = scmp.eq.s32.totalorder %s17, 0
    %p128 = por %p126, %p127
    %s129 = ssub.s32 %s11, %s18
    %p130 = scmp.eq.s32.totalorder %s129, 0
    %s132 = sadd.s32 %s131, 1
    %s133 = scalar_select %p130, %s131, %s132
    %p136 = pneg %p130
    %p137 = scmp.eq.s32.totalorder %s11, 1
    %p138 = por %p136, %p137
    %p139 = scmp.ne.s32.totalorder %s131, %s134
    %p140 = scmp.eq.s32.totalorder %s11, 0
    %p141 = por %p139, %p140
    %p142 = scmp.ne.s32.totalorder %s131, %s134
    %p143 = scmp.eq.s32.totalorder %s16, 1
    %p144 = por %p142, %p143
    %p145 = scmp.ne.s32.totalorder %s134, %s135
    %p146 = scmp.eq.s32.totalorder %s16, 0
    %p147 = por %p145, %p146
    %p148 = scmp.ne.s32.totalorder %s134, %s135
    %p149 = scmp.eq.s32.totalorder %s17, 1
    %p150 = por %p148, %p149
    %p152 = scmp.ne.s32.totalorder %s135, %s151
    %p153 = scmp.eq.s32.totalorder %s17, 0
    %p154 = por %p152, %p153
    %p155 = scmp.le.s32.totalorder 1, %s11
    %p156 = scmp.lt.s32.totalorder %s11, 3
    %p157 = pnand %p155, %p156
    %p158 = pneg %p157
    // Predicated region
    $region9: #{fire_block_nchw.1} parent=5 // pred_check
      _
    $region10: #{fire_block_nchw.1} parent=5 // pred_check_branch
      %160 = sbr.rel (%p157) target = $region12
    $region11: #{fire_block_nchw.1} parent=5 // pred_region
      %s161 = ssub.s32 %s11, 1
      // Predicated region
      $region13: #{fire_block_nchw.1} parent=11 // pred_check
        %p162 = pneg %p58
      $region14: #{fire_block_nchw.1} parent=11 // pred_check_branch
        %164 = sbr.rel (%p162) target = $region16
      $region15: #{fire_block_nchw.1} parent=11 // pred_region
        _
      $region16: #{fire_block_nchw.1} parent=11 // pred_fallthru
        _
      // Predicated region
      $region17: #{fire_block_nchw.1} parent=11 // pred_check
        %p165 = pneg %p79
      $region18: #{fire_block_nchw.1} parent=11 // pred_check_branch
        %167 = sbr.rel (%p165) target = $region20
      $region19: #{fire_block_nchw.1} parent=11 // pred_region
        _
      $region20: #{fire_block_nchw.1} parent=11 // pred_fallthru
        _
      // Predicated region
      $region21: #{fire_block_nchw.1} parent=11 // pred_check
        %p168 = pneg %p100
      $region22: #{fire_block_nchw.1} parent=11 // pred_check_branch
        %170 = sbr.rel (%p168) target = $region24
      $region23: #{fire_block_nchw.1} parent=11 // pred_region
        _
      $region24: #{fire_block_nchw.1} parent=11 // pred_fallthru
        _
      // Predicated region
      $region25: #{fire_block_nchw.1} parent=11 // pred_check
        %p171 = pneg %p121
      $region26: #{fire_block_nchw.1} parent=11 // pred_check_branch
        %173 = sbr.rel (%p171) target = $region28
      $region27: #{fire_block_nchw.1} parent=11 // pred_region
        _
      $region28: #{fire_block_nchw.1} parent=11 // pred_fallthru
        _
    $region12: #{fire_block_nchw.1} parent=5 // pred_fallthru
      _
    %p174 = scmp.lt.s32.totalorder %s11, 2
    // Predicated region
    $region29: #{fire_block_nchw.1} parent=5 // pred_check
      %p175 = pneg %p174
    $region30: #{fire_block_nchw.1} parent=5 // pred_check_branch
      %177 = sbr.rel (%p175) target = $region32
    $region31: #{fire_block_nchw.1} parent=5 // pred_region
      // Predicated region
      $region33: #{fire_block_nchw.1} parent=31 // pred_check
        %p178 = pneg %p31
      $region34: #{fire_block_nchw.1} parent=31 // pred_check_branch
        %180 = sbr.rel (%p178) target = $region36
      $region35: #{fire_block_nchw.1} parent=31 // pred_region
        %p181 = scmp.lt.s32.totalorder %s11, 1
        %s182 = scalar_select %p181, %s11, 1
        %s183 = smul.addr %s182, 32
        %s184 = smul.addr %s183, 8
        %s185 = scalar_lea.vmem %s0, %s184
      $region36: #{fire_block_nchw.1} parent=31 // pred_fallthru
        _
    $region32: #{fire_block_nchw.1} parent=5 // pred_fallthru
      _
    %p186 = scmp.le.s32.totalorder 1, %s11
    %p187 = scmp.lt.s32.totalorder %s11, 3
    %p188 = pnand %p186, %p187
    %p189 = pneg %p188
    // Predicated region
    $region37: #{fire_block_nchw.1} parent=5 // pred_check
      _
    $region38: #{fire_block_nchw.1} parent=5 // pred_check_branch
      %191 = sbr.rel (%p188) target = $region40
    $region39: #{fire_block_nchw.1} parent=5 // pred_region
      %s192 = ssub.s32 %s11, 1
      %p193 = scmp.lt.s32.totalorder %s16, 1
      %s194 = scalar_select %p193, %s16, 1
      %s195 = smul.addr %s194, 32
      %s196 = smul.addr %s195, 8
      %s197 = scalar_lea.vmem %s0, %s196
      %p198 = pneg %p37
      %p199 = pneg %p34
      %p200 = pneg %p58
      %p201 = pneg %p55
      %p202 = pneg %p79
      %p203 = pneg %p76
      %p204 = pneg %p100
      %p205 = pneg %p97
      %p206 = pneg %p121
      %p207 = pneg %p118
      %p208 = pneg %p147
      %p209 = pneg %p144
      %p210 = scmp.lt.s32.totalorder %s16, 1
      %s211 = scalar_select %p210, %s16, 1
      %s212 = smul.addr %s211, 32
      %s213 = smul.addr %s212, 8
      %s214 = scalar_lea.vmem %s5, %s213
      %p215 = scmp.lt.s32.totalorder %s16, 1
      %s216 = scalar_select %p215, %s16, 1
      %s217 = smul.addr %s216, 32
      %s218 = smul.addr %s217, 8
      %s219 = scalar_lea.vmem %s0, %s218
      %p220 = scmp.lt.s32.totalorder %s16, 1
      %s221 = scalar_select %p220, %s16, 1
      %s222 = smul.addr %s221, 32
      %s223 = smul.addr %s222, 8
      %s224 = scalar_lea.vmem %s5, %s223
      %p225 = scmp.eq.s32.totalorder %s16, 0
      // Predicated region
      $region41: #{fire_block_nchw.1} parent=39 // pred_check
        %p226 = pneg %p225
      $region42: #{fire_block_nchw.1} parent=39 // pred_check_branch
        %228 = sbr.rel (%p226) target = $region44
      $region43: #{fire_block_nchw.1} parent=39 // pred_region
        %vm229 = vcmask 64512
        %230 = vst.msk [vmem:[#allocation2] sm:$0xff] %vm229, 0.0
        %231 = vst.msk [vmem:[#allocation2 + $0x8] sm:$0xff] %vm229, 0.0
        %232 = vst.msk [vmem:[#allocation2 + $0x10] sm:$0xff] %vm229, 0.0
        %233 = vst.msk [vmem:[#allocation2 + $0x18] sm:$0xff] %vm229, 0.0
        %234 = vst.msk [vmem:[#allocation2 + $0x20] sm:$0xff] %vm229, 0.0
        %235 = vst.msk [vmem:[#allocation2 + $0x28] sm:$0xff] %vm229, 0.0
        %236 = vst.msk [vmem:[#allocation2 + $0x30] sm:$0xff] %vm229, 0.0
        %237 = vst.msk [vmem:[#allocation2 + $0x38] sm:$0xff] %vm229, 0.0
        %238 = vst.msk [vmem:[#allocation2 + $0x40] sm:$0xff] %vm229, 0.0
        %239 = vst.msk [vmem:[#allocation2 + $0x48] sm:$0xff] %vm229, 0.0
        %240 = vst.msk [vmem:[#allocation2 + $0x50] sm:$0xff] %vm229, 0.0
        %241 = vst.msk [vmem:[#allocation2 + $0x58] sm:$0xff] %vm229, 0.0
        %242 = vst.msk [vmem:[#allocation2 + $0x60] sm:$0xff] %vm229, 0.0
        %243 = vst.msk [vmem:[#allocation2 + $0x68] sm:$0xff] %vm229, 0.0
        %244 = vst.msk [vmem:[#allocation2 + $0x70] sm:$0xff] %vm229, 0.0
        %245 = vst.msk [vmem:[#allocation2 + $0x78] sm:$0xff] %vm229, 0.0
        %246 = vst.msk [vmem:[#allocation2 + $0x80] sm:$0xff] %vm229, 0.0
        %247 = vst.msk [vmem:[#allocation2 + $0x88] sm:$0xff] %vm229, 0.0
        %248 = vst.msk [vmem:[#allocation2 + $0x90] sm:$0xff] %vm229, 0.0
        %249 = vst.msk [vmem:[#allocation2 + $0x98] sm:$0xff] %vm229, 0.0
        %250 = vst.msk [vmem:[#allocation2 + $0xa0] sm:$0xff] %vm229, 0.0
        %251 = vst.msk [vmem:[#allocation2 + $0xa8] sm:$0xff] %vm229, 0.0
        %252 = vst.msk [vmem:[#allocation2 + $0xb0] sm:$0xff] %vm229, 0.0
        %253 = vst.msk [vmem:[#allocation2 + $0xb8] sm:$0xff] %vm229, 0.0
        %254 = vst.msk [vmem:[#allocation2 + $0xc0] sm:$0xff] %vm229, 0.0
        %255 = vst.msk [vmem:[#allocation2 + $0xc8] sm:$0xff] %vm229, 0.0
        %256 = vst.msk [vmem:[#allocation2 + $0xd0] sm:$0xff] %vm229, 0.0
        %257 = vst.msk [vmem:[#allocation2 + $0xd8] sm:$0xff] %vm229, 0.0
        %258 = vst.msk [vmem:[#allocation2 + $0xe0] sm:$0xff] %vm229, 0.0
        %259 = vst.msk [vmem:[#allocation2 + $0xe8] sm:$0xff] %vm229, 0.0
        %260 = vst.msk [vmem:[#allocation2 + $0xf0] sm:$0xff] %vm229, 0.0
        %261 = vst.msk [vmem:[#allocation2 + $0xf8] sm:$0xff] %vm229, 0.0
        %262 = vst.msk [vmem:[#allocation2 + $0x100] sm:$0xff] %vm229, 0.0
        %263 = vst.msk [vmem:[#allocation2 + $0x108] sm:$0xff] %vm229, 0.0
        %264 = vst.msk [vmem:[#allocation2 + $0x110] sm:$0xff] %vm229, 0.0
        %265 = vst.msk [vmem:[#allocation2 + $0x118] sm:$0xff] %vm229, 0.0
      $region44: #{fire_block_nchw.1} parent=39 // pred_fallthru
        _
      %v266 = vld [vmem:[%s219] sm:$0xff]
      %v267 = vld [vmem:[%s219 + $0x8] sm:$0xff]
      %v268 = vld [vmem:[%s219 + $0x10] sm:$0xff]
      %v269 = vld [vmem:[%s219 + $0x18] sm:$0xff]
      %v270 = vld [vmem:[%s219 + $0x20] sm:$0xff]
      %v271 = vld [vmem:[%s219 + $0x28] sm:$0xff]
      %v272 = vld [vmem:[%s219 + $0x30] sm:$0xff]
      %v273 = vld [vmem:[%s219 + $0x38] sm:$0xff]
      %v274 = vld [vmem:[%s219 + $0x40] sm:$0xff]
      %v275 = vld [vmem:[%s219 + $0x48] sm:$0xff]
      %v276 = vld [vmem:[%s219 + $0x50] sm:$0xff]
      %v277 = vld [vmem:[%s219 + $0x58] sm:$0xff]
      %v278 = vld [vmem:[%s219 + $0x60] sm:$0xff]
      %v279 = vld [vmem:[%s219 + $0x68] sm:$0xff]
      %v280 = vld [vmem:[%s219 + $0x70] sm:$0xff]
      %v281 = vld [vmem:[%s219 + $0x78] sm:$0xff]
      %v282 = vld [vmem:[%s219 + $0x80] sm:$0xff]
      %v283 = vld [vmem:[%s219 + $0x88] sm:$0xff]
      %v284 = vld [vmem:[%s219 + $0x90] sm:$0xff]
      %v285 = vld [vmem:[%s219 + $0x98] sm:$0xff]
      %v286 = vld [vmem:[%s219 + $0xa0] sm:$0xff]
      %v287 = vld [vmem:[%s219 + $0xa8] sm:$0xff]
      %v288 = vld [vmem:[%s219 + $0xb0] sm:$0xff]
      %v289 = vld [vmem:[%s219 + $0xb8] sm:$0xff]
      %v290 = vld [vmem:[%s219 + $0xc0] sm:$0xff]
      %v291 = vld [vmem:[%s219 + $0xc8] sm:$0xff]
      %v292 = vld [vmem:[%s219 + $0xd0] sm:$0xff]
      %v293 = vld [vmem:[%s219 + $0xd8] sm:$0xff]
      %v294 = vld [vmem:[%s219 + $0xe0] sm:$0xff]
      %v295 = vld [vmem:[%s219 + $0xe8] sm:$0xff]
      %v296 = vld [vmem:[%s219 + $0xf0] sm:$0xff]
      %v297 = vld [vmem:[%s219 + $0xf8] sm:$0xff]
      %v298 = vld [vmem:[%s1] sm:$0xf]
      %v299 = vld [vmem:[%s2] sm:$0x1]
      %v301 = vperm.slane %v299, 0
      %vm303 = vcmask 31744
      %v305 = vsel %vm303, %v266, 0
      %v308 = vsel %vm303, %v267, 0
      %v311 = vsel %vm303, %v268, 0
      %v314 = vsel %vm303, %v269, 0
      %v317 = vsel %vm303, %v270, 0
      %v320 = vsel %vm303, %v271, 0
      %v323 = vsel %vm303, %v272, 0
      %v326 = vsel %vm303, %v273, 0
      %v329 = vsel %vm303, %v274, 0
      %v332 = vsel %vm303, %v275, 0
      %v335 = vsel %vm303, %v276, 0
      %v338 = vsel %vm303, %v277, 0
      %v341 = vsel %vm303, %v278, 0
      %v344 = vsel %vm303, %v279, 0
      %v347 = vsel %vm303, %v280, 0
      %v350 = vsel %vm303, %v281, 0
      %v353 = vsel %vm303, %v282, 0
      %v356 = vsel %vm303, %v283, 0
      %v359 = vsel %vm303, %v284, 0
      %v362 = vsel %vm303, %v285, 0
      %v365 = vsel %vm303, %v286, 0
      %v368 = vsel %vm303, %v287, 0
      %v371 = vsel %vm303, %v288, 0
      %v374 = vsel %vm303, %v289, 0
      %v377 = vsel %vm303, %v290, 0
      %v380 = vsel %vm303, %v291, 0
      %v383 = vsel %vm303, %v292, 0
      %v386 = vsel %vm303, %v293, 0
      %v389 = vsel %vm303, %v294, 0
      %v392 = vsel %vm303, %v295, 0
      %v395 = vsel %vm303, %v296, 0
      %v398 = vsel %vm303, %v297, 0
      %vm400 = vcmask 1043456
      %v402 = vsel %vm400, %v298, 0
      %404 = vmatpush.msra.mxu0 0.0
      %405 = vmatpush.msra.mxu0 0.0
      %406 = vmatpush.msra.mxu0 0.0
      %407 = vmatpush.msra.mxu0 0.0
      %408 = vmatpush.msra.mxu0 0.0
      %409 = vmatpush.msra.mxu0 0.0
      %410 = vmatpush.msra.mxu0 0.0
      %411 = vmatpush.msra.mxu0 0.0
      %412 = vmatpush.msra.mxu0 0.0
      %413 = vmatpush.msra.mxu0 0.0
      %414 = vmatpush.msra.mxu0 0.0
      %415 = vmatpush.msra.mxu0 0.0
      %416 = vmatpush.msra.mxu0 0.0
      %417 = vmatpush.msra.mxu0 0.0
      %418 = vmatpush.msra.mxu0 0.0
      %419 = vmatpush.msra.mxu0 %v402
      %420 = vmatmul.f32.gmra.mxu0 %v305
      %v421 = vpop.f32.mrf.mxu0
      %v422 = vadd.f32 %v301, %v421
      %423 = vmatmul.f32.gmra.mxu0 %v308
      %v424 = vpop.f32.mrf.mxu0
      %v425 = vadd.f32 %v301, %v424
      %426 = vmatmul.f32.gmra.mxu0 %v311
      %v427 = vpop.f32.mrf.mxu0
      %v428 = vadd.f32 %v301, %v427
      %429 = vmatmul.f32.gmra.mxu0 %v314
      %v430 = vpop.f32.mrf.mxu0
      %v431 = vadd.f32 %v301, %v430
      %432 = vmatmul.f32.gmra.mxu0 %v317
      %v433 = vpop.f32.mrf.mxu0
      %v434 = vadd.f32 %v301, %v433
      %435 = vmatmul.f32.gmra.mxu0 %v320
      %v436 = vpop.f32.mrf.mxu0
      %v437 = vadd.f32 %v301, %v436
      %438 = vmatmul.f32.gmra.mxu0 %v323
      %v439 = vpop.f32.mrf.mxu0
      %v440 = vadd.f32 %v301, %v439
      %441 = vmatmul.f32.gmra.mxu0 %v326
      %v442 = vpop.f32.mrf.mxu0
      %v443 = vadd.f32 %v301, %v442
      %444 = vmatmul.f32.gmra.mxu0 %v329
      %v445 = vpop.f32.mrf.mxu0
      %v446 = vadd.f32 %v301, %v445
      %447 = vmatmul.f32.gmra.mxu0 %v332
      %v448 = vpop.f32.mrf.mxu0
      %v449 = vadd.f32 %v301, %v448
      %450 = vmatmul.f32.gmra.mxu0 %v335
      %v451 = vpop.f32.mrf.mxu0
      %v452 = vadd.f32 %v301, %v451
      %453 = vmatmul.f32.gmra.mxu0 %v338
      %v454 = vpop.f32.mrf.mxu0
      %v455 = vadd.f32 %v301, %v454
      %456 = vmatmul.f32.gmra.mxu0 %v341
      %v457 = vpop.f32.mrf.mxu0
      %v458 = vadd.f32 %v301, %v457
      %459 = vmatmul.f32.gmra.mxu0 %v344
      %v460 = vpop.f32.mrf.mxu0
      %v461 = vadd.f32 %v301, %v460
      %462 = vmatmul.f32.gmra.mxu0 %v347
      %v463 = vpop.f32.mrf.mxu0
      %v464 = vadd.f32 %v301, %v463
      %465 = vmatmul.f32.gmra.mxu0 %v350
      %v466 = vpop.f32.mrf.mxu0
      %v467 = vadd.f32 %v301, %v466
      %468 = vmatmul.f32.gmra.mxu0 %v353
      %v469 = vpop.f32.mrf.mxu0
      %v470 = vadd.f32 %v301, %v469
      %471 = vmatmul.f32.gmra.mxu0 %v356
      %v472 = vpop.f32.mrf.mxu0
      %v473 = vadd.f32 %v301, %v472
      %474 = vmatmul.f32.gmra.mxu0 %v359
      %v475 = vpop.f32.mrf.mxu0
      %v476 = vadd.f32 %v301, %v475
      %477 = vmatmul.f32.gmra.mxu0 %v362
      %v478 = vpop.f32.mrf.mxu0
      %v479 = vadd.f32 %v301, %v478
      %480 = vmatmul.f32.gmra.mxu0 %v365
      %v481 = vpop.f32.mrf.mxu0
      %v482 = vadd.f32 %v301, %v481
      %483 = vmatmul.f32.gmra.mxu0 %v368
      %v484 = vpop.f32.mrf.mxu0
      %v485 = vadd.f32 %v301, %v484
      %486 = vmatmul.f32.gmra.mxu0 %v371
      %v487 = vpop.f32.mrf.mxu0
      %v488 = vadd.f32 %v301, %v487
      %489 = vmatmul.f32.gmra.mxu0 %v374
      %v490 = vpop.f32.mrf.mxu0
      %v491 = vadd.f32 %v301, %v490
      %492 = vmatmul.f32.gmra.mxu0 %v377
      %v493 = vpop.f32.mrf.mxu0
      %v494 = vadd.f32 %v301, %v493
      %495 = vmatmul.f32.gmra.mxu0 %v380
      %v496 = vpop.f32.mrf.mxu0
      %v497 = vadd.f32 %v301, %v496
      %498 = vmatmul.f32.gmra.mxu0 %v383
      %v499 = vpop.f32.mrf.mxu0
      %v500 = vadd.f32 %v301, %v499
      %501 = vmatmul.f32.gmra.mxu0 %v386
      %v502 = vpop.f32.mrf.mxu0
      %v503 = vadd.f32 %v301, %v502
      %504 = vmatmul.f32.gmra.mxu0 %v389
      %v505 = vpop.f32.mrf.mxu0
      %v506 = vadd.f32 %v301, %v505
      %507 = vmatmul.f32.gmra.mxu0 %v392
      %v508 = vpop.f32.mrf.mxu0
      %v509 = vadd.f32 %v301, %v508
      %510 = vmatmul.f32.gmra.mxu0 %v395
      %v511 = vpop.f32.mrf.mxu0
      %v512 = vadd.f32 %v301, %v511
      %513 = vmatmul.f32.gmra.mxu0 %v398
      %v514 = vpop.f32.mrf.mxu0
      %v515 = vadd.f32 %v301, %v514
      %516 = vdwg.mxu0
      %v517 = vmax.f32 %v422, 0.0
      %v518 = vmax.f32 %v425, 0.0
      %v519 = vmax.f32 %v428, 0.0
      %v520 = vmax.f32 %v431, 0.0
      %v521 = vmax.f32 %v434, 0.0
      %v522 = vmax.f32 %v437, 0.0
      %v523 = vmax.f32 %v440, 0.0
      %v524 = vmax.f32 %v443, 0.0
      %v525 = vmax.f32 %v446, 0.0
      %v526 = vmax.f32 %v449, 0.0
      %v527 = vmax.f32 %v452, 0.0
      %v528 = vmax.f32 %v455, 0.0
      %v529 = vmax.f32 %v458, 0.0
      %v530 = vmax.f32 %v461, 0.0
      %v531 = vmax.f32 %v464, 0.0
      %v532 = vmax.f32 %v467, 0.0
      %v533 = vmax.f32 %v470, 0.0
      %v534 = vmax.f32 %v473, 0.0
      %v535 = vmax.f32 %v476, 0.0
      %v536 = vmax.f32 %v479, 0.0
      %v537 = vmax.f32 %v482, 0.0
      %v538 = vmax.f32 %v485, 0.0
      %v539 = vmax.f32 %v488, 0.0
      %v540 = vmax.f32 %v491, 0.0
      %v541 = vmax.f32 %v494, 0.0
      %v542 = vmax.f32 %v497, 0.0
      %v543 = vmax.f32 %v500, 0.0
      %v544 = vmax.f32 %v503, 0.0
      %v545 = vmax.f32 %v506, 0.0
      %v546 = vmax.f32 %v509, 0.0
      %v547 = vmax.f32 %v512, 0.0
      %v548 = vmax.f32 %v515, 0.0
      %s549 = scalar_lea.vmem [#allocation2], 16
      %vm550 = vcmask 64512
      %551 = vst.msk [vmem:[%s549] sm:$0xff] %vm550, %v517
      %552 = vst.msk [vmem:[%s549 + $0x8] sm:$0xff] %vm550, %v518
      %553 = vst.msk [vmem:[%s549 + $0x10] sm:$0xff] %vm550, %v519
      %554 = vst.msk [vmem:[%s549 + $0x18] sm:$0xff] %vm550, %v520
      %555 = vst.msk [vmem:[%s549 + $0x20] sm:$0xff] %vm550, %v521
      %556 = vst.msk [vmem:[%s549 + $0x28] sm:$0xff] %vm550, %v522
      %557 = vst.msk [vmem:[%s549 + $0x30] sm:$0xff] %vm550, %v523
      %558 = vst.msk [vmem:[%s549 + $0x38] sm:$0xff] %vm550, %v524
      %559 = vst.msk [vmem:[%s549 + $0x40] sm:$0xff] %vm550, %v525
      %560 = vst.msk [vmem:[%s549 + $0x48] sm:$0xff] %vm550, %v526
      %561 = vst.msk [vmem:[%s549 + $0x50] sm:$0xff] %vm550, %v527
      %562 = vst.msk [vmem:[%s549 + $0x58] sm:$0xff] %vm550, %v528
      %563 = vst.msk [vmem:[%s549 + $0x60] sm:$0xff] %vm550, %v529
      %564 = vst.msk [vmem:[%s549 + $0x68] sm:$0xff] %vm550, %v530
      %565 = vst.msk [vmem:[%s549 + $0x70] sm:$0xff] %vm550, %v531
      %566 = vst.msk [vmem:[%s549 + $0x78] sm:$0xff] %vm550, %v532
      %567 = vst.msk [vmem:[%s549 + $0x80] sm:$0xff] %vm550, %v533
      %568 = vst.msk [vmem:[%s549 + $0x88] sm:$0xff] %vm550, %v534
      %569 = vst.msk [vmem:[%s549 + $0x90] sm:$0xff] %vm550, %v535
      %570 = vst.msk [vmem:[%s549 + $0x98] sm:$0xff] %vm550, %v536
      %571 = vst.msk [vmem:[%s549 + $0xa0] sm:$0xff] %vm550, %v537
      %572 = vst.msk [vmem:[%s549 + $0xa8] sm:$0xff] %vm550, %v538
      %573 = vst.msk [vmem:[%s549 + $0xb0] sm:$0xff] %vm550, %v539
      %574 = vst.msk [vmem:[%s549 + $0xb8] sm:$0xff] %vm550, %v540
      %575 = vst.msk [vmem:[%s549 + $0xc0] sm:$0xff] %vm550, %v541
      %576 = vst.msk [vmem:[%s549 + $0xc8] sm:$0xff] %vm550, %v542
      %577 = vst.msk [vmem:[%s549 + $0xd0] sm:$0xff] %vm550, %v543
      %578 = vst.msk [vmem:[%s549 + $0xd8] sm:$0xff] %vm550, %v544
      %579 = vst.msk [vmem:[%s549 + $0xe0] sm:$0xff] %vm550, %v545
      %580 = vst.msk [vmem:[%s549 + $0xe8] sm:$0xff] %vm550, %v546
      %581 = vst.msk [vmem:[%s549 + $0xf0] sm:$0xff] %vm550, %v547
      %582 = vst.msk [vmem:[%s549 + $0xf8] sm:$0xff] %vm550, %v548
      %v583 = vlaneseq
      %v584 = vshrl.u32 %v583, 7
      %v585 = vadd.s32 %v584, 8
      %v586 = vld [vmem:[#allocation2] sm:$0xff]
      %v587 = vld [vmem:[#allocation2 + $0x8] sm:$0xff]
      %v588 = vld [vmem:[#allocation2 + $0x10] sm:$0xff]
      %v589 = vld [vmem:[#allocation2 + $0x18] sm:$0xff]
      %v590 = vld [vmem:[#allocation2 + $0x20] sm:$0xff]
      %v591 = vld [vmem:[#allocation2 + $0x28] sm:$0xff]
      %v592 = vld [vmem:[#allocation2 + $0x30] sm:$0xff]
      %v593 = vld [vmem:[#allocation2 + $0x38] sm:$0xff]
      %v594 = vld [vmem:[#allocation2 + $0x40] sm:$0xff]
      %v595 = vld [vmem:[#allocation2 + $0x48] sm:$0xff]
      %v596 = vld [vmem:[#allocation2 + $0x50] sm:$0xff]
      %v597 = vld [vmem:[#allocation2 + $0x58] sm:$0xff]
      %v598 = vld [vmem:[#allocation2 + $0x60] sm:$0xff]
      %v599 = vld [vmem:[#allocation2 + $0x68] sm:$0xff]
      %v600 = vld [vmem:[#allocation2 + $0x70] sm:$0xff]
      %v601 = vld [vmem:[#allocation2 + $0x78] sm:$0xff]
      %v602 = vld [vmem:[#allocation2 + $0x80] sm:$0xff]
      %v603 = vld [vmem:[#allocation2 + $0x88] sm:$0xff]
      %v604 = vld [vmem:[#allocation2 + $0x90] sm:$0xff]
      %v605 = vld [vmem:[#allocation2 + $0x98] sm:$0xff]
      %v606 = vld [vmem:[#allocation2 + $0xa0] sm:$0xff]
      %v607 = vld [vmem:[#allocation2 + $0xa8] sm:$0xff]
      %v608 = vld [vmem:[#allocation2 + $0xb0] sm:$0xff]
      %v609 = vld [vmem:[#allocation2 + $0xb8] sm:$0xff]
      %v610 = vld [vmem:[#allocation2 + $0xc0] sm:$0xff]
      %v611 = vld [vmem:[#allocation2 + $0xc8] sm:$0xff]
      %v612 = vld [vmem:[#allocation2 + $0xd0] sm:$0xff]
      %v613 = vld [vmem:[#allocation2 + $0xd8] sm:$0xff]
      %v614 = vld [vmem:[#allocation2 + $0xe0] sm:$0xff]
      %v615 = vld [vmem:[#allocation2 + $0xe8] sm:$0xff]
      %v616 = vld [vmem:[#allocation2 + $0xf0] sm:$0xff]
      %v617 = vld [vmem:[#allocation2 + $0xf8] sm:$0xff]
      %v618 = vld [vmem:[#allocation2 + $0x100] sm:$0xff]
      %v619 = vld [vmem:[#allocation2 + $0x108] sm:$0xff]
      %v620 = vld [vmem:[#allocation2 + $0x110] sm:$0xff]
      %v621 = vld [vmem:[#allocation2 + $0x118] sm:$0xff]
      %vm622 = vcmp.ge.s32.totalorder %v584, 1
      %vm623 = vcmp.ge.s32.totalorder %v585, 1
      %v624 = vrot.slane %v586, 7
      %v625 = vrot.slane %v588, 7
      %v626 = vrot.slane %v590, 7
      %v627 = vrot.slane %v592, 7
      %v628 = vrot.slane %v594, 7
      %v629 = vrot.slane %v596, 7
      %v630 = vrot.slane %v598, 7
      %v631 = vrot.slane %v600, 7
      %v632 = vrot.slane %v602, 7
      %v633 = vrot.slane %v604, 7
      %v634 = vrot.slane %v606, 7
      %v635 = vrot.slane %v608, 7
      %v636 = vrot.slane %v610, 7
      %v637 = vrot.slane %v612, 7
      %v638 = vrot.slane %v614, 7
      %v639 = vrot.slane %v616, 7
      %v640 = vrot.slane %v618, 7
      %v641 = vrot.slane %v620, 7
      %v642 = vrot.slane %v587, 7
      %v643 = vrot.slane %v589, 7
      %v644 = vrot.slane %v591, 7
      %v645 = vrot.slane %v593, 7
      %v646 = vrot.slane %v595, 7
      %v647 = vrot.slane %v597, 7
      %v648 = vrot.slane %v599, 7
      %v649 = vrot.slane %v601, 7
      %v650 = vrot.slane %v603, 7
      %v651 = vrot.slane %v605, 7
      %v652 = vrot.slane %v607, 7
      %v653 = vrot.slane %v609, 7
      %v654 = vrot.slane %v611, 7
      %v655 = vrot.slane %v613, 7
      %v656 = vrot.slane %v615, 7
      %v657 = vrot.slane %v617, 7
      %v658 = vrot.slane %v619, 7
      %v659 = vrot.slane %v621, 7
      %vm660 = vcmp.lt.s32.totalorder %v584, 1
      %v661 = vsel %vm660, %v624, %v642
      %v662 = vsel %vm660, %v625, %v643
      %v663 = vsel %vm660, %v626, %v644
      %v664 = vsel %vm660, %v627, %v645
      %v665 = vsel %vm660, %v628, %v646
      %v666 = vsel %vm660, %v629, %v647
      %v667 = vsel %vm660, %v630, %v648
      %v668 = vsel %vm660, %v631, %v649
      %v669 = vsel %vm660, %v632, %v650
      %v670 = vsel %vm660, %v633, %v651
      %v671 = vsel %vm660, %v634, %v652
      %v672 = vsel %vm660, %v635, %v653
      %v673 = vsel %vm660, %v636, %v654
      %v674 = vsel %vm660, %v637, %v655
      %v675 = vsel %vm660, %v638, %v656
      %v676 = vsel %vm660, %v639, %v657
      %v677 = vsel %vm660, %v640, %v658
      %v678 = vsel %vm660, %v641, %v659
      %v679 = vsel %vm660, %v642, %v624
      %v680 = vsel %vm660, %v643, %v625
      %v681 = vsel %vm660, %v644, %v626
      %v682 = vsel %vm660, %v645, %v627
      %v683 = vsel %vm660, %v646, %v628
      %v684 = vsel %vm660, %v647, %v629
      %v685 = vsel %vm660, %v648, %v630
      %v686 = vsel %vm660, %v649, %v631
      %v687 = vsel %vm660, %v650, %v632
      %v688 = vsel %vm660, %v651, %v633
      %v689 = vsel %vm660, %v652, %v634
      %v690 = vsel %vm660, %v653, %v635
      %v691 = vsel %vm660, %v654, %v636
      %v692 = vsel %vm660, %v655, %v637
      %v693 = vsel %vm660, %v656, %v638
      %v694 = vsel %vm660, %v657, %v639
      %v695 = vsel %vm660, %v658, %v640
      %v696 = vsel %vm660, %v659, %v641
      %v697 = vsel %vm622, 1, 0
      %v698 = vsel %vm623, 1, 0
      %vm699 = vcmp.eq.s32.totalorder %v697, 1
      %vm700 = vcmp.eq.s32.totalorder %v698, 1
      %v701 = vsel %vm699, %v679, 0.0
      %v702 = vsel %vm700, %v661, 0.0
      %v703 = vsel %vm699, %v680, 0.0
      %v704 = vsel %vm700, %v662, 0.0
      %v705 = vsel %vm699, %v681, 0.0
      %v706 = vsel %vm700, %v663, 0.0
      %v707 = vsel %vm699, %v682, 0.0
      %v708 = vsel %vm700, %v664, 0.0
      %v709 = vsel %vm699, %v683, 0.0
      %v710 = vsel %vm700, %v665, 0.0
      %v711 = vsel %vm699, %v684, 0.0
      %v712 = vsel %vm700, %v666, 0.0
      %v713 = vsel %vm699, %v685, 0.0
      %v714 = vsel %vm700, %v667, 0.0
      %v715 = vsel %vm699, %v686, 0.0
      %v716 = vsel %vm700, %v668, 0.0
      %v717 = vsel %vm699, %v687, 0.0
      %v718 = vsel %vm700, %v669, 0.0
      %v719 = vsel %vm699, %v688, 0.0
      %v720 = vsel %vm700, %v670, 0.0
      %v721 = vsel %vm699, %v689, 0.0
      %v722 = vsel %vm700, %v671, 0.0
      %v723 = vsel %vm699, %v690, 0.0
      %v724 = vsel %vm700, %v672, 0.0
      %v725 = vsel %vm699, %v691, 0.0
      %v726 = vsel %vm700, %v673, 0.0
      %v727 = vsel %vm699, %v692, 0.0
      %v728 = vsel %vm700, %v674, 0.0
      %v729 = vsel %vm699, %v693, 0.0
      %v730 = vsel %vm700, %v675, 0.0
      %v731 = vsel %vm699, %v694, 0.0
      %v732 = vsel %vm700, %v676, 0.0
      %v733 = vsel %vm699, %v695, 0.0
      %v734 = vsel %vm700, %v677, 0.0
      %v735 = vsel %vm699, %v696, 0.0
      %v736 = vsel %vm700, %v678, 0.0
      %vm737 = vcmp.le.s32.totalorder %v584, 14
      %vm738 = vcmp.le.s32.totalorder %v585, 14
      %v739 = vrot.slane %v586, 1
      %v740 = vrot.slane %v588, 1
      %v741 = vrot.slane %v590, 1
      %v742 = vrot.slane %v592, 1
      %v743 = vrot.slane %v594, 1
      %v744 = vrot.slane %v596, 1
      %v745 = vrot.slane %v598, 1
      %v746 = vrot.slane %v600, 1
      %v747 = vrot.slane %v602, 1
      %v748 = vrot.slane %v604, 1
      %v749 = vrot.slane %v606, 1
      %v750 = vrot.slane %v608, 1
      %v751 = vrot.slane %v610, 1
      %v752 = vrot.slane %v612, 1
      %v753 = vrot.slane %v614, 1
      %v754 = vrot.slane %v616, 1
      %v755 = vrot.slane %v618, 1
      %v756 = vrot.slane %v620, 1
      %v757 = vrot.slane %v587, 1
      %v758 = vrot.slane %v589, 1
      %v759 = vrot.slane %v591, 1
      %v760 = vrot.slane %v593, 1
      %v761 = vrot.slane %v595, 1
      %v762 = vrot.slane %v597, 1
      %v763 = vrot.slane %v599, 1
      %v764 = vrot.slane %v601, 1
      %v765 = vrot.slane %v603, 1
      %v766 = vrot.slane %v605, 1
      %v767 = vrot.slane %v607, 1
      %v768 = vrot.slane %v609, 1
      %v769 = vrot.slane %v611, 1
      %v770 = vrot.slane %v613, 1
      %v771 = vrot.slane %v615, 1
      %v772 = vrot.slane %v617, 1
      %v773 = vrot.slane %v619, 1
      %v774 = vrot.slane %v621, 1
      %vm775 = vcmp.lt.s32.totalorder %v584, 7
      %v776 = vsel %vm775, %v739, %v757
      %v777 = vsel %vm775, %v740, %v758
      %v778 = vsel %vm775, %v741, %v759
      %v779 = vsel %vm775, %v742, %v760
      %v780 = vsel %vm775, %v743, %v761
      %v781 = vsel %vm775, %v744, %v762
      %v782 = vsel %vm775, %v745, %v763
      %v783 = vsel %vm775, %v746, %v764
      %v784 = vsel %vm775, %v747, %v765
      %v785 = vsel %vm775, %v748, %v766
      %v786 = vsel %vm775, %v749, %v767
      %v787 = vsel %vm775, %v750, %v768
      %v788 = vsel %vm775, %v751, %v769
      %v789 = vsel %vm775, %v752, %v770
      %v790 = vsel %vm775, %v753, %v771
      %v791 = vsel %vm775, %v754, %v772
      %v792 = vsel %vm775, %v755, %v773
      %v793 = vsel %vm775, %v756, %v774
      %v794 = vsel %vm775, %v757, %v739
      %v795 = vsel %vm775, %v758, %v740
      %v796 = vsel %vm775, %v759, %v741
      %v797 = vsel %vm775, %v760, %v742
      %v798 = vsel %vm775, %v761, %v743
      %v799 = vsel %vm775, %v762, %v744
      %v800 = vsel %vm775, %v763, %v745
      %v801 = vsel %vm775, %v764, %v746
      %v802 = vsel %vm775, %v765, %v747
      %v803 = vsel %vm775, %v766, %v748
      %v804 = vsel %vm775, %v767, %v749
      %v805 = vsel %vm775, %v768, %v750
      %v806 = vsel %vm775, %v769, %v751
      %v807 = vsel %vm775, %v770, %v752
      %v808 = vsel %vm775, %v771, %v753
      %v809 = vsel %vm775, %v772, %v754
      %v810 = vsel %vm775, %v773, %v755
      %v811 = vsel %vm775, %v774, %v756
      %v812 = vsel %vm737, 1, 0
      %v813 = vsel %vm738, 1, 0
      %vm814 = vcmp.eq.s32.totalorder %v812, 1
      %vm815 = vcmp.eq.s32.totalorder %v813, 1
      %v816 = vsel %vm814, %v776, 0.0
      %v817 = vsel %vm815, %v794, 0.0
      %v818 = vsel %vm814, %v777, 0.0
      %v819 = vsel %vm815, %v795, 0.0
      %v820 = vsel %vm814, %v778, 0.0
      %v821 = vsel %vm815, %v796, 0.0
      %v822 = vsel %vm814, %v779, 0.0
      %v823 = vsel %vm815, %v797, 0.0
      %v824 = vsel %vm814, %v780, 0.0
      %v825 = vsel %vm815, %v798, 0.0
      %v826 = vsel %vm814, %v781, 0.0
      %v827 = vsel %vm815, %v799, 0.0
      %v828 = vsel %vm814, %v782, 0.0
      %v829 = vsel %vm815, %v800, 0.0
      %v830 = vsel %vm814, %v783, 0.0
      %v831 = vsel %vm815, %v801, 0.0
      %v832 = vsel %vm814, %v784, 0.0
      %v833 = vsel %vm815, %v802, 0.0
      %v834 = vsel %vm814, %v785, 0.0
      %v835 = vsel %vm815, %v803, 0.0
      %v836 = vsel %vm814, %v786, 0.0
      %v837 = vsel %vm815, %v804, 0.0
      %v838 = vsel %vm814, %v787, 0.0
      %v839 = vsel %vm815, %v805, 0.0
      %v840 = vsel %vm814, %v788, 0.0
      %v841 = vsel %vm815, %v806, 0.0
      %v842 = vsel %vm814, %v789, 0.0
      %v843 = vsel %vm815, %v807, 0.0
      %v844 = vsel %vm814, %v790, 0.0
      %v845 = vsel %vm815, %v808, 0.0
      %v846 = vsel %vm814, %v791, 0.0
      %v847 = vsel %vm815, %v809, 0.0
      %v848 = vsel %vm814, %v792, 0.0
      %v849 = vsel %vm815, %v810, 0.0
      %v850 = vsel %vm814, %v793, 0.0
      %v851 = vsel %vm815, %v811, 0.0
      %v852 = vld [vmem:[%s3] sm:$0xff]
      %s853 = scalar_lea.vmem %s3, 8
      %v854 = vld [vmem:[%s853] sm:$0xff]
      %v856 = vsel %vm550, %v586, 0
      %v859 = vsel %vm550, %v587, 0
      %v862 = vsel %vm550, %v588, 0
      %v865 = vsel %vm550, %v589, 0
      %v868 = vsel %vm550, %v590, 0
      %v871 = vsel %vm550, %v591, 0
      %v874 = vsel %vm550, %v592, 0
      %v877 = vsel %vm550, %v593, 0
      %v880 = vsel %vm550, %v594, 0
      %v883 = vsel %vm550, %v595, 0
      %v886 = vsel %vm550, %v596, 0
      %v889 = vsel %vm550, %v597, 0
      %v892 = vsel %vm550, %v598, 0
      %v895 = vsel %vm550, %v599, 0
      %v898 = vsel %vm550, %v600, 0
      %v901 = vsel %vm550, %v601, 0
      %v904 = vsel %vm550, %v602, 0
      %v907 = vsel %vm550, %v603, 0
      %v910 = vsel %vm550, %v604, 0
      %v913 = vsel %vm550, %v605, 0
      %v916 = vsel %vm550, %v606, 0
      %v919 = vsel %vm550, %v607, 0
      %v922 = vsel %vm550, %v608, 0
      %v925 = vsel %vm550, %v609, 0
      %v928 = vsel %vm550, %v610, 0
      %v931 = vsel %vm550, %v611, 0
      %v934 = vsel %vm550, %v612, 0
      %v937 = vsel %vm550, %v613, 0
      %v940 = vsel %vm550, %v614, 0
      %v943 = vsel %vm550, %v615, 0
      %v946 = vsel %vm550, %v616, 0
      %v949 = vsel %vm550, %v617, 0
      %951 = vmatpush.msra.mxu0 0.0
      %952 = vmatpush.msra.mxu0 0.0
      %953 = vmatpush.msra.mxu0 0.0
      %954 = vmatpush.msra.mxu0 0.0
      %955 = vmatpush.msra.mxu0 0.0
      %956 = vmatpush.msra.mxu0 0.0
      %957 = vmatpush.msra.mxu0 0.0
      %958 = vmatpush.msra.mxu0 0.0
      %959 = vmatpush.msra.mxu0 0.0
      %960 = vmatpush.msra.mxu0 0.0
      %961 = vmatpush.msra.mxu0 0.0
      %962 = vmatpush.msra.mxu0 0.0
      %963 = vmatpush.msra.mxu0 0.0
      %964 = vmatpush.msra.mxu0 0.0
      %965 = vmatpush.msra.mxu0 0.0
      %966 = vmatpush.msra.mxu0 %v854
      %967 = vmatmul.f32.gmra.mxu0 %v856
      %v968 = vpop.f32.mrf.mxu0
      %v969 = vadd.f32 0.0, %v968
      %970 = vmatmul.f32.gmra.mxu0 %v859
      %v971 = vpop.f32.mrf.mxu0
      %v972 = vadd.f32 0.0, %v971
      %973 = vmatmul.f32.gmra.mxu0 %v862
      %v974 = vpop.f32.mrf.mxu0
      %v975 = vadd.f32 0.0, %v974
      %976 = vmatmul.f32.gmra.mxu0 %v865
      %v977 = vpop.f32.mrf.mxu0
      %v978 = vadd.f32 0.0, %v977
      %979 = vmatmul.f32.gmra.mxu0 %v868
      %v980 = vpop.f32.mrf.mxu0
      %v981 = vadd.f32 0.0, %v980
      %982 = vmatmul.f32.gmra.mxu0 %v871
      %v983 = vpop.f32.mrf.mxu0
      %v984 = vadd.f32 0.0, %v983
      %985 = vmatmul.f32.gmra.mxu0 %v874
      %v986 = vpop.f32.mrf.mxu0
      %v987 = vadd.f32 0.0, %v986
      %988 = vmatmul.f32.gmra.mxu0 %v877
      %v989 = vpop.f32.mrf.mxu0
      %v990 = vadd.f32 0.0, %v989
      %991 = vmatmul.f32.gmra.mxu0 %v880
      %v992 = vpop.f32.mrf.mxu0
      %v993 = vadd.f32 0.0, %v992
      %994 = vmatmul.f32.gmra.mxu0 %v883
      %v995 = vpop.f32.mrf.mxu0
      %v996 = vadd.f32 0.0, %v995
      %997 = vmatmul.f32.gmra.mxu0 %v886
      %v998 = vpop.f32.mrf.mxu0
      %v999 = vadd.f32 0.0, %v998
      %1000 = vmatmul.f32.gmra.mxu0 %v889
      %v1001 = vpop.f32.mrf.mxu0
      %v1002 = vadd.f32 0.0, %v1001
      %1003 = vmatmul.f32.gmra.mxu0 %v892
      %v1004 = vpop.f32.mrf.mxu0
      %v1005 = vadd.f32 0.0, %v1004
      %1006 = vmatmul.f32.gmra.mxu0 %v895
      %v1007 = vpop.f32.mrf.mxu0
      %v1008 = vadd.f32 0.0, %v1007
      %1009 = vmatmul.f32.gmra.mxu0 %v898
      %v1010 = vpop.f32.mrf.mxu0
      %v1011 = vadd.f32 0.0, %v1010
      %1012 = vmatmul.f32.gmra.mxu0 %v901
      %v1013 = vpop.f32.mrf.mxu0
      %v1014 = vadd.f32 0.0, %v1013
      %1015 = vmatmul.f32.gmra.mxu0 %v904
      %v1016 = vpop.f32.mrf.mxu0
      %v1017 = vadd.f32 0.0, %v1016
      %1018 = vmatmul.f32.gmra.mxu0 %v907
      %v1019 = vpop.f32.mrf.mxu0
      %v1020 = vadd.f32 0.0, %v1019
      %1021 = vmatmul.f32.gmra.mxu0 %v910
      %v1022 = vpop.f32.mrf.mxu0
      %v1023 = vadd.f32 0.0, %v1022
      %1024 = vmatmul.f32.gmra.mxu0 %v913
      %v1025 = vpop.f32.mrf.mxu0
      %v1026 = vadd.f32 0.0, %v1025
      %1027 = vmatmul.f32.gmra.mxu0 %v916
      %v1028 = vpop.f32.mrf.mxu0
      %v1029 = vadd.f32 0.0, %v1028
      %1030 = vmatmul.f32.gmra.mxu0 %v919
      %v1031 = vpop.f32.mrf.mxu0
      %v1032 = vadd.f32 0.0, %v1031
      %1033 = vmatmul.f32.gmra.mxu0 %v922
      %v1034 = vpop.f32.mrf.mxu0
      %v1035 = vadd.f32 0.0, %v1034
      %1036 = vmatmul.f32.gmra.mxu0 %v925
      %v1037 = vpop.f32.mrf.mxu0
      %v1038 = vadd.f32 0.0, %v1037
      %1039 = vmatmul.f32.gmra.mxu0 %v928
      %v1040 = vpop.f32.mrf.mxu0
      %v1041 = vadd.f32 0.0, %v1040
      %1042 = vmatmul.f32.gmra.mxu0 %v931
      %v1043 = vpop.f32.mrf.mxu0
      %v1044 = vadd.f32 0.0, %v1043
      %1045 = vmatmul.f32.gmra.mxu0 %v934
      %v1046 = vpop.f32.mrf.mxu0
      %v1047 = vadd.f32 0.0, %v1046
      %1048 = vmatmul.f32.gmra.mxu0 %v937
      %v1049 = vpop.f32.mrf.mxu0
      %v1050 = vadd.f32 0.0, %v1049
      %1051 = vmatmul.f32.gmra.mxu0 %v940
      %v1052 = vpop.f32.mrf.mxu0
      %v1053 = vadd.f32 0.0, %v1052
      %1054 = vmatmul.f32.gmra.mxu0 %v943
      %v1055 = vpop.f32.mrf.mxu0
      %v1056 = vadd.f32 0.0, %v1055
      %1057 = vmatmul.f32.gmra.mxu0 %v946
      %v1058 = vpop.f32.mrf.mxu0
      %v1059 = vadd.f32 0.0, %v1058
      %1060 = vmatmul.f32.gmra.mxu0 %v949
      %v1061 = vpop.f32.mrf.mxu0
      %v1062 = vadd.f32 0.0, %v1061
      %1063 = vdwg.mxu0
      %v1065 = vsel %vm550, %v701, 0
      %v1068 = vsel %vm550, %v702, 0
      %v1071 = vsel %vm550, %v703, 0
      %v1074 = vsel %vm550, %v704, 0
      %v1077 = vsel %vm550, %v705, 0
      %v1080 = vsel %vm550, %v706, 0
      %v1083 = vsel %vm550, %v707, 0
      %v1086 = vsel %vm550, %v708, 0
      %v1089 = vsel %vm550, %v709, 0
      %v1092 = vsel %vm550, %v710, 0
      %v1095 = vsel %vm550, %v711, 0
      %v1098 = vsel %vm550, %v712, 0
      %v1101 = vsel %vm550, %v713, 0
      %v1104 = vsel %vm550, %v714, 0
      %v1107 = vsel %vm550, %v715, 0
      %v1110 = vsel %vm550, %v716, 0
      %v1113 = vsel %vm550, %v717, 0
      %v1116 = vsel %vm550, %v718, 0
      %v1119 = vsel %vm550, %v719, 0
      %v1122 = vsel %vm550, %v720, 0
      %v1125 = vsel %vm550, %v721, 0
      %v1128 = vsel %vm550, %v722, 0
      %v1131 = vsel %vm550, %v723, 0
      %v1134 = vsel %vm550, %v724, 0
      %v1137 = vsel %vm550, %v725, 0
      %v1140 = vsel %vm550, %v726, 0
      %v1143 = vsel %vm550, %v727, 0
      %v1146 = vsel %vm550, %v728, 0
      %v1149 = vsel %vm550, %v729, 0
      %v1152 = vsel %vm550, %v730, 0
      %v1155 = vsel %vm550, %v731, 0
      %v1158 = vsel %vm550, %v732, 0
      %1160 = vmatpush.msra.mxu0 0.0
      %1161 = vmatpush.msra.mxu0 0.0
      %1162 = vmatpush.msra.mxu0 0.0
      %1163 = vmatpush.msra.mxu0 0.0
      %1164 = vmatpush.msra.mxu0 0.0
      %1165 = vmatpush.msra.mxu0 0.0
      %1166 = vmatpush.msra.mxu0 0.0
      %1167 = vmatpush.msra.mxu0 0.0
      %1168 = vmatpush.msra.mxu0 0.0
      %1169 = vmatpush.msra.mxu0 0.0
      %1170 = vmatpush.msra.mxu0 0.0
      %1171 = vmatpush.msra.mxu0 0.0
      %1172 = vmatpush.msra.mxu0 0.0
      %1173 = vmatpush.msra.mxu0 0.0
      %1174 = vmatpush.msra.mxu0 0.0
      %1175 = vmatpush.msra.mxu0 %v852
      %1176 = vmatmul.f32.gmra.mxu0 %v1065
      %v1177 = vpop.f32.mrf.mxu0
      %v1178 = vadd.f32 %v969, %v1177
      %1179 = vmatmul.f32.gmra.mxu0 %v1068
      %v1180 = vpop.f32.mrf.mxu0
      %v1181 = vadd.f32 %v972, %v1180
      %1182 = vmatmul.f32.gmra.mxu0 %v1071
      %v1183 = vpop.f32.mrf.mxu0
      %v1184 = vadd.f32 %v975, %v1183
      %1185 = vmatmul.f32.gmra.mxu0 %v1074
      %v1186 = vpop.f32.mrf.mxu0
      %v1187 = vadd.f32 %v978, %v1186
      %1188 = vmatmul.f32.gmra.mxu0 %v1077
      %v1189 = vpop.f32.mrf.mxu0
      %v1190 = vadd.f32 %v981, %v1189
      %1191 = vmatmul.f32.gmra.mxu0 %v1080
      %v1192 = vpop.f32.mrf.mxu0
      %v1193 = vadd.f32 %v984, %v1192
      %1194 = vmatmul.f32.gmra.mxu0 %v1083
      %v1195 = vpop.f32.mrf.mxu0
      %v1196 = vadd.f32 %v987, %v1195
      %1197 = vmatmul.f32.gmra.mxu0 %v1086
      %v1198 = vpop.f32.mrf.mxu0
      %v1199 = vadd.f32 %v990, %v1198
      %1200 = vmatmul.f32.gmra.mxu0 %v1089
      %v1201 = vpop.f32.mrf.mxu0
      %v1202 = vadd.f32 %v993, %v1201
      %1203 = vmatmul.f32.gmra.mxu0 %v1092
      %v1204 = vpop.f32.mrf.mxu0
      %v1205 = vadd.f32 %v996, %v1204
      %1206 = vmatmul.f32.gmra.mxu0 %v1095
      %v1207 = vpop.f32.mrf.mxu0
      %v1208 = vadd.f32 %v999, %v1207
      %1209 = vmatmul.f32.gmra.mxu0 %v1098
      %v1210 = vpop.f32.mrf.mxu0
      %v1211 = vadd.f32 %v1002, %v1210
      %1212 = vmatmul.f32.gmra.mxu0 %v1101
      %v1213 = vpop.f32.mrf.mxu0
      %v1214 = vadd.f32 %v1005, %v1213
      %1215 = vmatmul.f32.gmra.mxu0 %v1104
      %v1216 = vpop.f32.mrf.mxu0
      %v1217 = vadd.f32 %v1008, %v1216
      %1218 = vmatmul.f32.gmra.mxu0 %v1107
      %v1219 = vpop.f32.mrf.mxu0
      %v1220 = vadd.f32 %v1011, %v1219
      %1221 = vmatmul.f32.gmra.mxu0 %v1110
      %v1222 = vpop.f32.mrf.mxu0
      %v1223 = vadd.f32 %v1014, %v1222
      %1224 = vmatmul.f32.gmra.mxu0 %v1113
      %v1225 = vpop.f32.mrf.mxu0
      %v1226 = vadd.f32 %v1017, %v1225
      %1227 = vmatmul.f32.gmra.mxu0 %v1116
      %v1228 = vpop.f32.mrf.mxu0
      %v1229 = vadd.f32 %v1020, %v1228
      %1230 = vmatmul.f32.gmra.mxu0 %v1119
      %v1231 = vpop.f32.mrf.mxu0
      %v1232 = vadd.f32 %v1023, %v1231
      %1233 = vmatmul.f32.gmra.mxu0 %v1122
      %v1234 = vpop.f32.mrf.mxu0
      %v1235 = vadd.f32 %v1026, %v1234
      %1236 = vmatmul.f32.gmra.mxu0 %v1125
      %v1237 = vpop.f32.mrf.mxu0
      %v1238 = vadd.f32 %v1029, %v1237
      %1239 = vmatmul.f32.gmra.mxu0 %v1128
      %v1240 = vpop.f32.mrf.mxu0
      %v1241 = vadd.f32 %v1032, %v1240
      %1242 = vmatmul.f32.gmra.mxu0 %v1131
      %v1243 = vpop.f32.mrf.mxu0
      %v1244 = vadd.f32 %v1035, %v1243
      %1245 = vmatmul.f32.gmra.mxu0 %v1134
      %v1246 = vpop.f32.mrf.mxu0
      %v1247 = vadd.f32 %v1038, %v1246
      %1248 = vmatmul.f32.gmra.mxu0 %v1137
      %v1249 = vpop.f32.mrf.mxu0
      %v1250 = vadd.f32 %v1041, %v1249
      %1251 = vmatmul.f32.gmra.mxu0 %v1140
      %v1252 = vpop.f32.mrf.mxu0
      %v1253 = vadd.f32 %v1044, %v1252
      %1254 = vmatmul.f32.gmra.mxu0 %v1143
      %v1255 = vpop.f32.mrf.mxu0
      %v1256 = vadd.f32 %v1047, %v1255
      %1257 = vmatmul.f32.gmra.mxu0 %v1146
      %v1258 = vpop.f32.mrf.mxu0
      %v1259 = vadd.f32 %v1050, %v1258
      %1260 = vmatmul.f32.gmra.mxu0 %v1149
      %v1261 = vpop.f32.mrf.mxu0
      %v1262 = vadd.f32 %v1053, %v1261
      %1263 = vmatmul.f32.gmra.mxu0 %v1152
      %v1264 = vpop.f32.mrf.mxu0
      %v1265 = vadd.f32 %v1056, %v1264
      %1266 = vmatmul.f32.gmra.mxu0 %v1155
      %v1267 = vpop.f32.mrf.mxu0
      %v1268 = vadd.f32 %v1059, %v1267
      %1269 = vmatmul.f32.gmra.mxu0 %v1158
      %v1270 = vpop.f32.mrf.mxu0
      %v1271 = vadd.f32 %v1062, %v1270
      %1272 = vdwg.mxu0
      %s1273 = scalar_lea.vmem %s3, 16
      %v1274 = vld [vmem:[%s1273] sm:$0xff]
      %v1276 = vsel %vm550, %v816, 0
      %v1279 = vsel %vm550, %v817, 0
      %v1282 = vsel %vm550, %v818, 0
      %v1285 = vsel %vm550, %v819, 0
      %v1288 = vsel %vm550, %v820, 0
      %v1291 = vsel %vm550, %v821, 0
      %v1294 = vsel %vm550, %v822, 0
      %v1297 = vsel %vm550, %v823, 0
      %v1300 = vsel %vm550, %v824, 0
      %v1303 = vsel %vm550, %v825, 0
      %v1306 = vsel %vm550, %v826, 0
      %v1309 = vsel %vm550, %v827, 0
      %v1312 = vsel %vm550, %v828, 0
      %v1315 = vsel %vm550, %v829, 0
      %v1318 = vsel %vm550, %v830, 0
      %v1321 = vsel %vm550, %v831, 0
      %v1324 = vsel %vm550, %v832, 0
      %v1327 = vsel %vm550, %v833, 0
      %v1330 = vsel %vm550, %v834, 0
      %v1333 = vsel %vm550, %v835, 0
      %v1336 = vsel %vm550, %v836, 0
      %v1339 = vsel %vm550, %v837, 0
      %v1342 = vsel %vm550, %v838, 0
      %v1345 = vsel %vm550, %v839, 0
      %v1348 = vsel %vm550, %v840, 0
      %v1351 = vsel %vm550, %v841, 0
      %v1354 = vsel %vm550, %v842, 0
      %v1357 = vsel %vm550, %v843, 0
      %v1360 = vsel %vm550, %v844, 0
      %v1363 = vsel %vm550, %v845, 0
      %v1366 = vsel %vm550, %v846, 0
      %v1369 = vsel %vm550, %v847, 0
      %1371 = vmatpush.msra.mxu0 0.0
      %1372 = vmatpush.msra.mxu0 0.0
      %1373 = vmatpush.msra.mxu0 0.0
      %1374 = vmatpush.msra.mxu0 0.0
      %1375 = vmatpush.msra.mxu0 0.0
      %1376 = vmatpush.msra.mxu0 0.0
      %1377 = vmatpush.msra.mxu0 0.0
      %1378 = vmatpush.msra.mxu0 0.0
      %1379 = vmatpush.msra.mxu0 0.0
      %1380 = vmatpush.msra.mxu0 0.0
      %1381 = vmatpush.msra.mxu0 0.0
      %1382 = vmatpush.msra.mxu0 0.0
      %1383 = vmatpush.msra.mxu0 0.0
      %1384 = vmatpush.msra.mxu0 0.0
      %1385 = vmatpush.msra.mxu0 0.0
      %1386 = vmatpush.msra.mxu0 %v1274
      %1387 = vmatmul.f32.gmra.mxu0 %v1276
      %v1388 = vpop.f32.mrf.mxu0
      %v1389 = vadd.f32 0.0, %v1388
      %1390 = vmatmul.f32.gmra.mxu0 %v1279
      %v1391 = vpop.f32.mrf.mxu0
      %v1392 = vadd.f32 0.0, %v1391
      %1393 = vmatmul.f32.gmra.mxu0 %v1282
      %v1394 = vpop.f32.mrf.mxu0
      %v1395 = vadd.f32 0.0, %v1394
      %1396 = vmatmul.f32.gmra.mxu0 %v1285
      %v1397 = vpop.f32.mrf.mxu0
      %v1398 = vadd.f32 0.0, %v1397
      %1399 = vmatmul.f32.gmra.mxu0 %v1288
      %v1400 = vpop.f32.mrf.mxu0
      %v1401 = vadd.f32 0.0, %v1400
      %1402 = vmatmul.f32.gmra.mxu0 %v1291
      %v1403 = vpop.f32.mrf.mxu0
      %v1404 = vadd.f32 0.0, %v1403
      %1405 = vmatmul.f32.gmra.mxu0 %v1294
      %v1406 = vpop.f32.mrf.mxu0
      %v1407 = vadd.f32 0.0, %v1406
      %1408 = vmatmul.f32.gmra.mxu0 %v1297
      %v1409 = vpop.f32.mrf.mxu0
      %v1410 = vadd.f32 0.0, %v1409
      %1411 = vmatmul.f32.gmra.mxu0 %v1300
      %v1412 = vpop.f32.mrf.mxu0
      %v1413 = vadd.f32 0.0, %v1412
      %1414 = vmatmul.f32.gmra.mxu0 %v1303
      %v1415 = vpop.f32.mrf.mxu0
      %v1416 = vadd.f32 0.0, %v1415
      %1417 = vmatmul.f32.gmra.mxu0 %v1306
      %v1418 = vpop.f32.mrf.mxu0
      %v1419 = vadd.f32 0.0, %v1418
      %1420 = vmatmul.f32.gmra.mxu0 %v1309
      %v1421 = vpop.f32.mrf.mxu0
      %v1422 = vadd.f32 0.0, %v1421
      %1423 = vmatmul.f32.gmra.mxu0 %v1312
      %v1424 = vpop.f32.mrf.mxu0
      %v1425 = vadd.f32 0.0, %v1424
      %1426 = vmatmul.f32.gmra.mxu0 %v1315
      %v1427 = vpop.f32.mrf.mxu0
      %v1428 = vadd.f32 0.0, %v1427
      %1429 = vmatmul.f32.gmra.mxu0 %v1318
      %v1430 = vpop.f32.mrf.mxu0
      %v1431 = vadd.f32 0.0, %v1430
      %1432 = vmatmul.f32.gmra.mxu0 %v1321
      %v1433 = vpop.f32.mrf.mxu0
      %v1434 = vadd.f32 0.0, %v1433
      %1435 = vmatmul.f32.gmra.mxu0 %v1324
      %v1436 = vpop.f32.mrf.mxu0
      %v1437 = vadd.f32 0.0, %v1436
      %1438 = vmatmul.f32.gmra.mxu0 %v1327
      %v1439 = vpop.f32.mrf.mxu0
      %v1440 = vadd.f32 0.0, %v1439
      %1441 = vmatmul.f32.gmra.mxu0 %v1330
      %v1442 = vpop.f32.mrf.mxu0
      %v1443 = vadd.f32 0.0, %v1442
      %1444 = vmatmul.f32.gmra.mxu0 %v1333
      %v1445 = vpop.f32.mrf.mxu0
      %v1446 = vadd.f32 0.0, %v1445
      %1447 = vmatmul.f32.gmra.mxu0 %v1336
      %v1448 = vpop.f32.mrf.mxu0
      %v1449 = vadd.f32 0.0, %v1448
      %1450 = vmatmul.f32.gmra.mxu0 %v1339
      %v1451 = vpop.f32.mrf.mxu0
      %v1452 = vadd.f32 0.0, %v1451
      %1453 = vmatmul.f32.gmra.mxu0 %v1342
      %v1454 = vpop.f32.mrf.mxu0
      %v1455 = vadd.f32 0.0, %v1454
      %1456 = vmatmul.f32.gmra.mxu0 %v1345
      %v1457 = vpop.f32.mrf.mxu0
      %v1458 = vadd.f32 0.0, %v1457
      %1459 = vmatmul.f32.gmra.mxu0 %v1348
      %v1460 = vpop.f32.mrf.mxu0
      %v1461 = vadd.f32 0.0, %v1460
      %1462 = vmatmul.f32.gmra.mxu0 %v1351
      %v1463 = vpop.f32.mrf.mxu0
      %v1464 = vadd.f32 0.0, %v1463
      %1465 = vmatmul.f32.gmra.mxu0 %v1354
      %v1466 = vpop.f32.mrf.mxu0
      %v1467 = vadd.f32 0.0, %v1466
      %1468 = vmatmul.f32.gmra.mxu0 %v1357
      %v1469 = vpop.f32.mrf.mxu0
      %v1470 = vadd.f32 0.0, %v1469
      %1471 = vmatmul.f32.gmra.mxu0 %v1360
      %v1472 = vpop.f32.mrf.mxu0
      %v1473 = vadd.f32 0.0, %v1472
      %1474 = vmatmul.f32.gmra.mxu0 %v1363
      %v1475 = vpop.f32.mrf.mxu0
      %v1476 = vadd.f32 0.0, %v1475
      %1477 = vmatmul.f32.gmra.mxu0 %v1366
      %v1478 = vpop.f32.mrf.mxu0
      %v1479 = vadd.f32 0.0, %v1478
      %1480 = vmatmul.f32.gmra.mxu0 %v1369
      %v1481 = vpop.f32.mrf.mxu0
      %v1482 = vadd.f32 0.0, %v1481
      %1483 = vdwg.mxu0
      %v1484 = vadd.f32 %v1178, %v1389
      %v1485 = vadd.f32 %v1181, %v1392
      %v1486 = vadd.f32 %v1184, %v1395
      %v1487 = vadd.f32 %v1187, %v1398
      %v1488 = vadd.f32 %v1190, %v1401
      %v1489 = vadd.f32 %v1193, %v1404
      %v1490 = vadd.f32 %v1196, %v1407
      %v1491 = vadd.f32 %v1199, %v1410
      %v1492 = vadd.f32 %v1202, %v1413
      %v1493 = vadd.f32 %v1205, %v1416
      %v1494 = vadd.f32 %v1208, %v1419
      %v1495 = vadd.f32 %v1211, %v1422
      %v1496 = vadd.f32 %v1214, %v1425
      %v1497 = vadd.f32 %v1217, %v1428
      %v1498 = vadd.f32 %v1220, %v1431
      %v1499 = vadd.f32 %v1223, %v1434
      %v1500 = vadd.f32 %v1226, %v1437
      %v1501 = vadd.f32 %v1229, %v1440
      %v1502 = vadd.f32 %v1232, %v1443
      %v1503 = vadd.f32 %v1235, %v1446
      %v1504 = vadd.f32 %v1238, %v1449
      %v1505 = vadd.f32 %v1241, %v1452
      %v1506 = vadd.f32 %v1244, %v1455
      %v1507 = vadd.f32 %v1247, %v1458
      %v1508 = vadd.f32 %v1250, %v1461
      %v1509 = vadd.f32 %v1253, %v1464
      %v1510 = vadd.f32 %v1256, %v1467
      %v1511 = vadd.f32 %v1259, %v1470
      %v1512 = vadd.f32 %v1262, %v1473
      %v1513 = vadd.f32 %v1265, %v1476
      %v1514 = vadd.f32 %v1268, %v1479
      %v1515 = vadd.f32 %v1271, %v1482
      %s1516 = scalar_lea.vmem %s3, 24
      %v1517 = vld [vmem:[%s1516] sm:$0xff]
      %v1519 = vsel %vm550, %v733, 0
      %v1522 = vsel %vm550, %v734, 0
      %1524 = vmatpush.msra.mxu0 0.0
      %1525 = vmatpush.msra.mxu0 0.0
      %1526 = vmatpush.msra.mxu0 0.0
      %1527 = vmatpush.msra.mxu0 0.0
      %1528 = vmatpush.msra.mxu0 0.0
      %1529 = vmatpush.msra.mxu0 0.0
      %1530 = vmatpush.msra.mxu0 0.0
      %1531 = vmatpush.msra.mxu0 0.0
      %1532 = vmatpush.msra.mxu0 0.0
      %1533 = vmatpush.msra.mxu0 0.0
      %1534 = vmatpush.msra.mxu0 0.0
      %1535 = vmatpush.msra.mxu0 0.0
      %1536 = vmatpush.msra.mxu0 0.0
      %1537 = vmatpush.msra.mxu0 0.0
      %1538 = vmatpush.msra.mxu0 0.0
      %1539 = vmatpush.msra.mxu0 %v1517
      %1540 = vmatmul.f32.gmra.mxu0 %v1071
      %v1541 = vpop.f32.mrf.mxu0
      %v1542 = vadd.f32 0.0, %v1541
      %1543 = vmatmul.f32.gmra.mxu0 %v1074
      %v1544 = vpop.f32.mrf.mxu0
      %v1545 = vadd.f32 0.0, %v1544
      %1546 = vmatmul.f32.gmra.mxu0 %v1077
      %v1547 = vpop.f32.mrf.mxu0
      %v1548 = vadd.f32 0.0, %v1547
      %1549 = vmatmul.f32.gmra.mxu0 %v1080
      %v1550 = vpop.f32.mrf.mxu0
      %v1551 = vadd.f32 0.0, %v1550
      %1552 = vmatmul.f32.gmra.mxu0 %v1083
      %v1553 = vpop.f32.mrf.mxu0
      %v1554 = vadd.f32 0.0, %v1553
      %1555 = vmatmul.f32.gmra.mxu0 %v1086
      %v1556 = vpop.f32.mrf.mxu0
      %v1557 = vadd.f32 0.0, %v1556
      %1558 = vmatmul.f32.gmra.mxu0 %v1089
      %v1559 = vpop.f32.mrf.mxu0
      %v1560 = vadd.f32 0.0, %v1559
      %1561 = vmatmul.f32.gmra.mxu0 %v1092
      %v1562 = vpop.f32.mrf.mxu0
      %v1563 = vadd.f32 0.0, %v1562
      %1564 = vmatmul.f32.gmra.mxu0 %v1095
      %v1565 = vpop.f32.mrf.mxu0
      %v1566 = vadd.f32 0.0, %v1565
      %1567 = vmatmul.f32.gmra.mxu0 %v1098
      %v1568 = vpop.f32.mrf.mxu0
      %v1569 = vadd.f32 0.0, %v1568
      %1570 = vmatmul.f32.gmra.mxu0 %v1101
      %v1571 = vpop.f32.mrf.mxu0
      %v1572 = vadd.f32 0.0, %v1571
      %1573 = vmatmul.f32.gmra.mxu0 %v1104
      %v1574 = vpop.f32.mrf.mxu0
      %v1575 = vadd.f32 0.0, %v1574
      %1576 = vmatmul.f32.gmra.mxu0 %v1107
      %v1577 = vpop.f32.mrf.mxu0
      %v1578 = vadd.f32 0.0, %v1577
      %1579 = vmatmul.f32.gmra.mxu0 %v1110
      %v1580 = vpop.f32.mrf.mxu0
      %v1581 = vadd.f32 0.0, %v1580
      %1582 = vmatmul.f32.gmra.mxu0 %v1113
      %v1583 = vpop.f32.mrf.mxu0
      %v1584 = vadd.f32 0.0, %v1583
      %1585 = vmatmul.f32.gmra.mxu0 %v1116
      %v1586 = vpop.f32.mrf.mxu0
      %v1587 = vadd.f32 0.0, %v1586
      %1588 = vmatmul.f32.gmra.mxu0 %v1119
      %v1589 = vpop.f32.mrf.mxu0
      %v1590 = vadd.f32 0.0, %v1589
      %1591 = vmatmul.f32.gmra.mxu0 %v1122
      %v1592 = vpop.f32.mrf.mxu0
      %v1593 = vadd.f32 0.0, %v1592
      %1594 = vmatmul.f32.gmra.mxu0 %v1125
      %v1595 = vpop.f32.mrf.mxu0
      %v1596 = vadd.f32 0.0, %v1595
      %1597 = vmatmul.f32.gmra.mxu0 %v1128
      %v1598 = vpop.f32.mrf.mxu0
      %v1599 = vadd.f32 0.0, %v1598
      %1600 = vmatmul.f32.gmra.mxu0 %v1131
      %v1601 = vpop.f32.mrf.mxu0
      %v1602 = vadd.f32 0.0, %v1601
      %1603 = vmatmul.f32.gmra.mxu0 %v1134
      %v1604 = vpop.f32.mrf.mxu0
      %v1605 = vadd.f32 0.0, %v1604
      %1606 = vmatmul.f32.gmra.mxu0 %v1137
      %v1607 = vpop.f32.mrf.mxu0
      %v1608 = vadd.f32 0.0, %v1607
      %1609 = vmatmul.f32.gmra.mxu0 %v1140
      %v1610 = vpop.f32.mrf.mxu0
      %v1611 = vadd.f32 0.0, %v1610
      %1612 = vmatmul.f32.gmra.mxu0 %v1143
      %v1613 = vpop.f32.mrf.mxu0
      %v1614 = vadd.f32 0.0, %v1613
      %1615 = vmatmul.f32.gmra.mxu0 %v1146
      %v1616 = vpop.f32.mrf.mxu0
      %v1617 = vadd.f32 0.0, %v1616
      %1618 = vmatmul.f32.gmra.mxu0 %v1149
      %v1619 = vpop.f32.mrf.mxu0
      %v1620 = vadd.f32 0.0, %v1619
      %1621 = vmatmul.f32.gmra.mxu0 %v1152
      %v1622 = vpop.f32.mrf.mxu0
      %v1623 = vadd.f32 0.0, %v1622
      %1624 = vmatmul.f32.gmra.mxu0 %v1155
      %v1625 = vpop.f32.mrf.mxu0
      %v1626 = vadd.f32 0.0, %v1625
      %1627 = vmatmul.f32.gmra.mxu0 %v1158
      %v1628 = vpop.f32.mrf.mxu0
      %v1629 = vadd.f32 0.0, %v1628
      %1630 = vmatmul.f32.gmra.mxu0 %v1519
      %v1631 = vpop.f32.mrf.mxu0
      %v1632 = vadd.f32 0.0, %v1631
      %1633 = vmatmul.f32.gmra.mxu0 %v1522
      %v1634 = vpop.f32.mrf.mxu0
      %v1635 = vadd.f32 0.0, %v1634
      %1636 = vdwg.mxu0
      %v1637 = vadd.f32 %v1484, %v1542
      %v1638 = vadd.f32 %v1485, %v1545
      %v1639 = vadd.f32 %v1486, %v1548
      %v1640 = vadd.f32 %v1487, %v1551
      %v1641 = vadd.f32 %v1488, %v1554
      %v1642 = vadd.f32 %v1489, %v1557
      %v1643 = vadd.f32 %v1490, %v1560
      %v1644 = vadd.f32 %v1491, %v1563
      %v1645 = vadd.f32 %v1492, %v1566
      %v1646 = vadd.f32 %v1493, %v1569
      %v1647 = vadd.f32 %v1494, %v1572
      %v1648 = vadd.f32 %v1495, %v1575
      %v1649 = vadd.f32 %v1496, %v1578
      %v1650 = vadd.f32 %v1497, %v1581
      %v1651 = vadd.f32 %v1498, %v1584
      %v1652 = vadd.f32 %v1499, %v1587
      %v1653 = vadd.f32 %v1500, %v1590
      %v1654 = vadd.f32 %v1501, %v1593
      %v1655 = vadd.f32 %v1502, %v1596
      %v1656 = vadd.f32 %v1503, %v1599
      %v1657 = vadd.f32 %v1504, %v1602
      %v1658 = vadd.f32 %v1505, %v1605
      %v1659 = vadd.f32 %v1506, %v1608
      %v1660 = vadd.f32 %v1507, %v1611
      %v1661 = vadd.f32 %v1508, %v1614
      %v1662 = vadd.f32 %v1509, %v1617
      %v1663 = vadd.f32 %v1510, %v1620
      %v1664 = vadd.f32 %v1511, %v1623
      %v1665 = vadd.f32 %v1512, %v1626
      %v1666 = vadd.f32 %v1513, %v1629
      %v1667 = vadd.f32 %v1514, %v1632
      %v1668 = vadd.f32 %v1515, %v1635
      %s1669 = scalar_lea.vmem %s3, 32
      %v1670 = vld [vmem:[%s1669] sm:$0xff]
      %v1672 = vsel %vm550, %v618, 0
      %v1675 = vsel %vm550, %v619, 0
      %1677 = vmatpush.msra.mxu0 0.0
      %1678 = vmatpush.msra.mxu0 0.0
      %1679 = vmatpush.msra.mxu0 0.0
      %1680 = vmatpush.msra.mxu0 0.0
      %1681 = vmatpush.msra.mxu0 0.0
      %1682 = vmatpush.msra.mxu0 0.0
      %1683 = vmatpush.msra.mxu0 0.0
      %1684 = vmatpush.msra.mxu0 0.0
      %1685 = vmatpush.msra.mxu0 0.0
      %1686 = vmatpush.msra.mxu0 0.0
      %1687 = vmatpush.msra.mxu0 0.0
      %1688 = vmatpush.msra.mxu0 0.0
      %1689 = vmatpush.msra.mxu0 0.0
      %1690 = vmatpush.msra.mxu0 0.0
      %1691 = vmatpush.msra.mxu0 0.0
      %1692 = vmatpush.msra.mxu0 %v1670
      %1693 = vmatmul.f32.gmra.mxu0 %v862
      %v1694 = vpop.f32.mrf.mxu0
      %v1695 = vadd.f32 0.0, %v1694
      %1696 = vmatmul.f32.gmra.mxu0 %v865
      %v1697 = vpop.f32.mrf.mxu0
      %v1698 = vadd.f32 0.0, %v1697
      %1699 = vmatmul.f32.gmra.mxu0 %v868
      %v1700 = vpop.f32.mrf.mxu0
      %v1701 = vadd.f32 0.0, %v1700
      %1702 = vmatmul.f32.gmra.mxu0 %v871
      %v1703 = vpop.f32.mrf.mxu0
      %v1704 = vadd.f32 0.0, %v1703
      %1705 = vmatmul.f32.gmra.mxu0 %v874
      %v1706 = vpop.f32.mrf.mxu0
      %v1707 = vadd.f32 0.0, %v1706
      %1708 = vmatmul.f32.gmra.mxu0 %v877
      %v1709 = vpop.f32.mrf.mxu0
      %v1710 = vadd.f32 0.0, %v1709
      %1711 = vmatmul.f32.gmra.mxu0 %v880
      %v1712 = vpop.f32.mrf.mxu0
      %v1713 = vadd.f32 0.0, %v1712
      %1714 = vmatmul.f32.gmra.mxu0 %v883
      %v1715 = vpop.f32.mrf.mxu0
      %v1716 = vadd.f32 0.0, %v1715
      %1717 = vmatmul.f32.gmra.mxu0 %v886
      %v1718 = vpop.f32.mrf.mxu0
      %v1719 = vadd.f32 0.0, %v1718
      %1720 = vmatmul.f32.gmra.mxu0 %v889
      %v1721 = vpop.f32.mrf.mxu0
      %v1722 = vadd.f32 0.0, %v1721
      %1723 = vmatmul.f32.gmra.mxu0 %v892
      %v1724 = vpop.f32.mrf.mxu0
      %v1725 = vadd.f32 0.0, %v1724
      %1726 = vmatmul.f32.gmra.mxu0 %v895
      %v1727 = vpop.f32.mrf.mxu0
      %v1728 = vadd.f32 0.0, %v1727
      %1729 = vmatmul.f32.gmra.mxu0 %v898
      %v1730 = vpop.f32.mrf.mxu0
      %v1731 = vadd.f32 0.0, %v1730
      %1732 = vmatmul.f32.gmra.mxu0 %v901
      %v1733 = vpop.f32.mrf.mxu0
      %v1734 = vadd.f32 0.0, %v1733
      %1735 = vmatmul.f32.gmra.mxu0 %v904
      %v1736 = vpop.f32.mrf.mxu0
      %v1737 = vadd.f32 0.0, %v1736
      %1738 = vmatmul.f32.gmra.mxu0 %v907
      %v1739 = vpop.f32.mrf.mxu0
      %v1740 = vadd.f32 0.0, %v1739
      %1741 = vmatmul.f32.gmra.mxu0 %v910
      %v1742 = vpop.f32.mrf.mxu0
      %v1743 = vadd.f32 0.0, %v1742
      %1744 = vmatmul.f32.gmra.mxu0 %v913
      %v1745 = vpop.f32.mrf.mxu0
      %v1746 = vadd.f32 0.0, %v1745
      %1747 = vmatmul.f32.gmra.mxu0 %v916
      %v1748 = vpop.f32.mrf.mxu0
      %v1749 = vadd.f32 0.0, %v1748
      %1750 = vmatmul.f32.gmra.mxu0 %v919
      %v1751 = vpop.f32.mrf.mxu0
      %v1752 = vadd.f32 0.0, %v1751
      %1753 = vmatmul.f32.gmra.mxu0 %v922
      %v1754 = vpop.f32.mrf.mxu0
      %v1755 = vadd.f32 0.0, %v1754
      %1756 = vmatmul.f32.gmra.mxu0 %v925
      %v1757 = vpop.f32.mrf.mxu0
      %v1758 = vadd.f32 0.0, %v1757
      %1759 = vmatmul.f32.gmra.mxu0 %v928
      %v1760 = vpop.f32.mrf.mxu0
      %v1761 = vadd.f32 0.0, %v1760
      %1762 = vmatmul.f32.gmra.mxu0 %v931
      %v1763 = vpop.f32.mrf.mxu0
      %v1764 = vadd.f32 0.0, %v1763
      %1765 = vmatmul.f32.gmra.mxu0 %v934
      %v1766 = vpop.f32.mrf.mxu0
      %v1767 = vadd.f32 0.0, %v1766
      %1768 = vmatmul.f32.gmra.mxu0 %v937
      %v1769 = vpop.f32.mrf.mxu0
      %v1770 = vadd.f32 0.0, %v1769
      %1771 = vmatmul.f32.gmra.mxu0 %v940
      %v1772 = vpop.f32.mrf.mxu0
      %v1773 = vadd.f32 0.0, %v1772
      %1774 = vmatmul.f32.gmra.mxu0 %v943
      %v1775 = vpop.f32.mrf.mxu0
      %v1776 = vadd.f32 0.0, %v1775
      %1777 = vmatmul.f32.gmra.mxu0 %v946
      %v1778 = vpop.f32.mrf.mxu0
      %v1779 = vadd.f32 0.0, %v1778
      %1780 = vmatmul.f32.gmra.mxu0 %v949
      %v1781 = vpop.f32.mrf.mxu0
      %v1782 = vadd.f32 0.0, %v1781
      %1783 = vmatmul.f32.gmra.mxu0 %v1672
      %v1784 = vpop.f32.mrf.mxu0
      %v1785 = vadd.f32 0.0, %v1784
      %1786 = vmatmul.f32.gmra.mxu0 %v1675
      %v1787 = vpop.f32.mrf.mxu0
      %v1788 = vadd.f32 0.0, %v1787
      %1789 = vdwg.mxu0
      %v1790 = vadd.f32 %v1637, %v1695
      %v1791 = vadd.f32 %v1638, %v1698
      %v1792 = vadd.f32 %v1639, %v1701
      %v1793 = vadd.f32 %v1640, %v1704
      %v1794 = vadd.f32 %v1641, %v1707
      %v1795 = vadd.f32 %v1642, %v1710
      %v1796 = vadd.f32 %v1643, %v1713
      %v1797 = vadd.f32 %v1644, %v1716
      %v1798 = vadd.f32 %v1645, %v1719
      %v1799 = vadd.f32 %v1646, %v1722
      %v1800 = vadd.f32 %v1647, %v1725
      %v1801 = vadd.f32 %v1648, %v1728
      %v1802 = vadd.f32 %v1649, %v1731
      %v1803 = vadd.f32 %v1650, %v1734
      %v1804 = vadd.f32 %v1651, %v1737
      %v1805 = vadd.f32 %v1652, %v1740
      %v1806 = vadd.f32 %v1653, %v1743
      %v1807 = vadd.f32 %v1654, %v1746
      %v1808 = vadd.f32 %v1655, %v1749
      %v1809 = vadd.f32 %v1656, %v1752
      %v1810 = vadd.f32 %v1657, %v1755
      %v1811 = vadd.f32 %v1658, %v1758
      %v1812 = vadd.f32 %v1659, %v1761
      %v1813 = vadd.f32 %v1660, %v1764
      %v1814 = vadd.f32 %v1661, %v1767
      %v1815 = vadd.f32 %v1662, %v1770
      %v1816 = vadd.f32 %v1663, %v1773
      %v1817 = vadd.f32 %v1664, %v1776
      %v1818 = vadd.f32 %v1665, %v1779
      %v1819 = vadd.f32 %v1666, %v1782
      %v1820 = vadd.f32 %v1667, %v1785
      %v1821 = vadd.f32 %v1668, %v1788
      %s1822 = scalar_lea.vmem %s3, 40
      %v1823 = vld [vmem:[%s1822] sm:$0xff]
      %v1825 = vsel %vm550, %v848, 0
      %v1828 = vsel %vm550, %v849, 0
      %1830 = vmatpush.msra.mxu0 0.0
      %1831 = vmatpush.msra.mxu0 0.0
      %1832 = vmatpush.msra.mxu0 0.0
      %1833 = vmatpush.msra.mxu0 0.0
      %1834 = vmatpush.msra.mxu0 0.0
      %1835 = vmatpush.msra.mxu0 0.0
      %1836 = vmatpush.msra.mxu0 0.0
      %1837 = vmatpush.msra.mxu0 0.0
      %1838 = vmatpush.msra.mxu0 0.0
      %1839 = vmatpush.msra.mxu0 0.0
      %1840 = vmatpush.msra.mxu0 0.0
      %1841 = vmatpush.msra.mxu0 0.0
      %1842 = vmatpush.msra.mxu0 0.0
      %1843 = vmatpush.msra.mxu0 0.0
      %1844 = vmatpush.msra.mxu0 0.0
      %1845 = vmatpush.msra.mxu0 %v1823
      %1846 = vmatmul.f32.gmra.mxu0 %v1282
      %v1847 = vpop.f32.mrf.mxu0
      %v1848 = vadd.f32 0.0, %v1847
      %1849 = vmatmul.f32.gmra.mxu0 %v1285
      %v1850 = vpop.f32.mrf.mxu0
      %v1851 = vadd.f32 0.0, %v1850
      %1852 = vmatmul.f32.gmra.mxu0 %v1288
      %v1853 = vpop.f32.mrf.mxu0
      %v1854 = vadd.f32 0.0, %v1853
      %1855 = vmatmul.f32.gmra.mxu0 %v1291
      %v1856 = vpop.f32.mrf.mxu0
      %v1857 = vadd.f32 0.0, %v1856
      %1858 = vmatmul.f32.gmra.mxu0 %v1294
      %v1859 = vpop.f32.mrf.mxu0
      %v1860 = vadd.f32 0.0, %v1859
      %1861 = vmatmul.f32.gmra.mxu0 %v1297
      %v1862 = vpop.f32.mrf.mxu0
      %v1863 = vadd.f32 0.0, %v1862
      %1864 = vmatmul.f32.gmra.mxu0 %v1300
      %v1865 = vpop.f32.mrf.mxu0
      %v1866 = vadd.f32 0.0, %v1865
      %1867 = vmatmul.f32.gmra.mxu0 %v1303
      %v1868 = vpop.f32.mrf.mxu0
      %v1869 = vadd.f32 0.0, %v1868
      %1870 = vmatmul.f32.gmra.mxu0 %v1306
      %v1871 = vpop.f32.mrf.mxu0
      %v1872 = vadd.f32 0.0, %v1871
      %1873 = vmatmul.f32.gmra.mxu0 %v1309
      %v1874 = vpop.f32.mrf.mxu0
      %v1875 = vadd.f32 0.0, %v1874
      %1876 = vmatmul.f32.gmra.mxu0 %v1312
      %v1877 = vpop.f32.mrf.mxu0
      %v1878 = vadd.f32 0.0, %v1877
      %1879 = vmatmul.f32.gmra.mxu0 %v1315
      %v1880 = vpop.f32.mrf.mxu0
      %v1881 = vadd.f32 0.0, %v1880
      %1882 = vmatmul.f32.gmra.mxu0 %v1318
      %v1883 = vpop.f32.mrf.mxu0
      %v1884 = vadd.f32 0.0, %v1883
      %1885 = vmatmul.f32.gmra.mxu0 %v1321
      %v1886 = vpop.f32.mrf.mxu0
      %v1887 = vadd.f32 0.0, %v1886
      %1888 = vmatmul.f32.gmra.mxu0 %v1324
      %v1889 = vpop.f32.mrf.mxu0
      %v1890 = vadd.f32 0.0, %v1889
      %1891 = vmatmul.f32.gmra.mxu0 %v1327
      %v1892 = vpop.f32.mrf.mxu0
      %v1893 = vadd.f32 0.0, %v1892
      %1894 = vmatmul.f32.gmra.mxu0 %v1330
      %v1895 = vpop.f32.mrf.mxu0
      %v1896 = vadd.f32 0.0, %v1895
      %1897 = vmatmul.f32.gmra.mxu0 %v1333
      %v1898 = vpop.f32.mrf.mxu0
      %v1899 = vadd.f32 0.0, %v1898
      %1900 = vmatmul.f32.gmra.mxu0 %v1336
      %v1901 = vpop.f32.mrf.mxu0
      %v1902 = vadd.f32 0.0, %v1901
      %1903 = vmatmul.f32.gmra.mxu0 %v1339
      %v1904 = vpop.f32.mrf.mxu0
      %v1905 = vadd.f32 0.0, %v1904
      %1906 = vmatmul.f32.gmra.mxu0 %v1342
      %v1907 = vpop.f32.mrf.mxu0
      %v1908 = vadd.f32 0.0, %v1907
      %1909 = vmatmul.f32.gmra.mxu0 %v1345
      %v1910 = vpop.f32.mrf.mxu0
      %v1911 = vadd.f32 0.0, %v1910
      %1912 = vmatmul.f32.gmra.mxu0 %v1348
      %v1913 = vpop.f32.mrf.mxu0
      %v1914 = vadd.f32 0.0, %v1913
      %1915 = vmatmul.f32.gmra.mxu0 %v1351
      %v1916 = vpop.f32.mrf.mxu0
      %v1917 = vadd.f32 0.0, %v1916
      %1918 = vmatmul.f32.gmra.mxu0 %v1354
      %v1919 = vpop.f32.mrf.mxu0
      %v1920 = vadd.f32 0.0, %v1919
      %1921 = vmatmul.f32.gmra.mxu0 %v1357
      %v1922 = vpop.f32.mrf.mxu0
      %v1923 = vadd.f32 0.0, %v1922
      %1924 = vmatmul.f32.gmra.mxu0 %v1360
      %v1925 = vpop.f32.mrf.mxu0
      %v1926 = vadd.f32 0.0, %v1925
      %1927 = vmatmul.f32.gmra.mxu0 %v1363
      %v1928 = vpop.f32.mrf.mxu0
      %v1929 = vadd.f32 0.0, %v1928
      %1930 = vmatmul.f32.gmra.mxu0 %v1366
      %v1931 = vpop.f32.mrf.mxu0
      %v1932 = vadd.f32 0.0, %v1931
      %1933 = vmatmul.f32.gmra.mxu0 %v1369
      %v1934 = vpop.f32.mrf.mxu0
      %v1935 = vadd.f32 0.0, %v1934
      %1936 = vmatmul.f32.gmra.mxu0 %v1825
      %v1937 = vpop.f32.mrf.mxu0
      %v1938 = vadd.f32 0.0, %v1937
      %1939 = vmatmul.f32.gmra.mxu0 %v1828
      %v1940 = vpop.f32.mrf.mxu0
      %v1941 = vadd.f32 0.0, %v1940
      %1942 = vdwg.mxu0
      %v1943 = vadd.f32 %v1790, %v1848
      %v1944 = vadd.f32 %v1791, %v1851
      %v1945 = vadd.f32 %v1792, %v1854
      %v1946 = vadd.f32 %v1793, %v1857
      %v1947 = vadd.f32 %v1794, %v1860
      %v1948 = vadd.f32 %v1795, %v1863
      %v1949 = vadd.f32 %v1796, %v1866
      %v1950 = vadd.f32 %v1797, %v1869
      %v1951 = vadd.f32 %v1798, %v1872
      %v1952 = vadd.f32 %v1799, %v1875
      %v1953 = vadd.f32 %v1800, %v1878
      %v1954 = vadd.f32 %v1801, %v1881
      %v1955 = vadd.f32 %v1802, %v1884
      %v1956 = vadd.f32 %v1803, %v1887
      %v1957 = vadd.f32 %v1804, %v1890
      %v1958 = vadd.f32 %v1805, %v1893
      %v1959 = vadd.f32 %v1806, %v1896
      %v1960 = vadd.f32 %v1807, %v1899
      %v1961 = vadd.f32 %v1808, %v1902
      %v1962 = vadd.f32 %v1809, %v1905
      %v1963 = vadd.f32 %v1810, %v1908
      %v1964 = vadd.f32 %v1811, %v1911
      %v1965 = vadd.f32 %v1812, %v1914
      %v1966 = vadd.f32 %v1813, %v1917
      %v1967 = vadd.f32 %v1814, %v1920
      %v1968 = vadd.f32 %v1815, %v1923
      %v1969 = vadd.f32 %v1816, %v1926
      %v1970 = vadd.f32 %v1817, %v1929
      %v1971 = vadd.f32 %v1818, %v1932
      %v1972 = vadd.f32 %v1819, %v1935
      %v1973 = vadd.f32 %v1820, %v1938
      %v1974 = vadd.f32 %v1821, %v1941
      %s1975 = scalar_lea.vmem %s3, 48
      %v1976 = vld [vmem:[%s1975] sm:$0xff]
      %v1978 = vsel %vm550, %v735, 0
      %v1981 = vsel %vm550, %v736, 0
      %1983 = vmatpush.msra.mxu0 0.0
      %1984 = vmatpush.msra.mxu0 0.0
      %1985 = vmatpush.msra.mxu0 0.0
      %1986 = vmatpush.msra.mxu0 0.0
      %1987 = vmatpush.msra.mxu0 0.0
      %1988 = vmatpush.msra.mxu0 0.0
      %1989 = vmatpush.msra.mxu0 0.0
      %1990 = vmatpush.msra.mxu0 0.0
      %1991 = vmatpush.msra.mxu0 0.0
      %1992 = vmatpush.msra.mxu0 0.0
      %1993 = vmatpush.msra.mxu0 0.0
      %1994 = vmatpush.msra.mxu0 0.0
      %1995 = vmatpush.msra.mxu0 0.0
      %1996 = vmatpush.msra.mxu0 0.0
      %1997 = vmatpush.msra.mxu0 0.0
      %1998 = vmatpush.msra.mxu0 %v1976
      %1999 = vmatmul.f32.gmra.mxu0 %v1077
      %v2000 = vpop.f32.mrf.mxu0
      %v2001 = vadd.f32 0.0, %v2000
      %2002 = vmatmul.f32.gmra.mxu0 %v1080
      %v2003 = vpop.f32.mrf.mxu0
      %v2004 = vadd.f32 0.0, %v2003
      %2005 = vmatmul.f32.gmra.mxu0 %v1083
      %v2006 = vpop.f32.mrf.mxu0
      %v2007 = vadd.f32 0.0, %v2006
      %2008 = vmatmul.f32.gmra.mxu0 %v1086
      %v2009 = vpop.f32.mrf.mxu0
      %v2010 = vadd.f32 0.0, %v2009
      %2011 = vmatmul.f32.gmra.mxu0 %v1089
      %v2012 = vpop.f32.mrf.mxu0
      %v2013 = vadd.f32 0.0, %v2012
      %2014 = vmatmul.f32.gmra.mxu0 %v1092
      %v2015 = vpop.f32.mrf.mxu0
      %v2016 = vadd.f32 0.0, %v2015
      %2017 = vmatmul.f32.gmra.mxu0 %v1095
      %v2018 = vpop.f32.mrf.mxu0
      %v2019 = vadd.f32 0.0, %v2018
      %2020 = vmatmul.f32.gmra.mxu0 %v1098
      %v2021 = vpop.f32.mrf.mxu0
      %v2022 = vadd.f32 0.0, %v2021
      %2023 = vmatmul.f32.gmra.mxu0 %v1101
      %v2024 = vpop.f32.mrf.mxu0
      %v2025 = vadd.f32 0.0, %v2024
      %2026 = vmatmul.f32.gmra.mxu0 %v1104
      %v2027 = vpop.f32.mrf.mxu0
      %v2028 = vadd.f32 0.0, %v2027
      %2029 = vmatmul.f32.gmra.mxu0 %v1107
      %v2030 = vpop.f32.mrf.mxu0
      %v2031 = vadd.f32 0.0, %v2030
      %2032 = vmatmul.f32.gmra.mxu0 %v1110
      %v2033 = vpop.f32.mrf.mxu0
      %v2034 = vadd.f32 0.0, %v2033
      %2035 = vmatmul.f32.gmra.mxu0 %v1113
      %v2036 = vpop.f32.mrf.mxu0
      %v2037 = vadd.f32 0.0, %v2036
      %2038 = vmatmul.f32.gmra.mxu0 %v1116
      %v2039 = vpop.f32.mrf.mxu0
      %v2040 = vadd.f32 0.0, %v2039
      %2041 = vmatmul.f32.gmra.mxu0 %v1119
      %v2042 = vpop.f32.mrf.mxu0
      %v2043 = vadd.f32 0.0, %v2042
      %2044 = vmatmul.f32.gmra.mxu0 %v1122
      %v2045 = vpop.f32.mrf.mxu0
      %v2046 = vadd.f32 0.0, %v2045
      %2047 = vmatmul.f32.gmra.mxu0 %v1125
      %v2048 = vpop.f32.mrf.mxu0
      %v2049 = vadd.f32 0.0, %v2048
      %2050 = vmatmul.f32.gmra.mxu0 %v1128
      %v2051 = vpop.f32.mrf.mxu0
      %v2052 = vadd.f32 0.0, %v2051
      %2053 = vmatmul.f32.gmra.mxu0 %v1131
      %v2054 = vpop.f32.mrf.mxu0
      %v2055 = vadd.f32 0.0, %v2054
      %2056 = vmatmul.f32.gmra.mxu0 %v1134
      %v2057 = vpop.f32.mrf.mxu0
      %v2058 = vadd.f32 0.0, %v2057
      %2059 = vmatmul.f32.gmra.mxu0 %v1137
      %v2060 = vpop.f32.mrf.mxu0
      %v2061 = vadd.f32 0.0, %v2060
      %2062 = vmatmul.f32.gmra.mxu0 %v1140
      %v2063 = vpop.f32.mrf.mxu0
      %v2064 = vadd.f32 0.0, %v2063
      %2065 = vmatmul.f32.gmra.mxu0 %v1143
      %v2066 = vpop.f32.mrf.mxu0
      %v2067 = vadd.f32 0.0, %v2066
      %2068 = vmatmul.f32.gmra.mxu0 %v1146
      %v2069 = vpop.f32.mrf.mxu0
      %v2070 = vadd.f32 0.0, %v2069
      %2071 = vmatmul.f32.gmra.mxu0 %v1149
      %v2072 = vpop.f32.mrf.mxu0
      %v2073 = vadd.f32 0.0, %v2072
      %2074 = vmatmul.f32.gmra.mxu0 %v1152
      %v2075 = vpop.f32.mrf.mxu0
      %v2076 = vadd.f32 0.0, %v2075
      %2077 = vmatmul.f32.gmra.mxu0 %v1155
      %v2078 = vpop.f32.mrf.mxu0
      %v2079 = vadd.f32 0.0, %v2078
      %2080 = vmatmul.f32.gmra.mxu0 %v1158
      %v2081 = vpop.f32.mrf.mxu0
      %v2082 = vadd.f32 0.0, %v2081
      %2083 = vmatmul.f32.gmra.mxu0 %v1519
      %v2084 = vpop.f32.mrf.mxu0
      %v2085 = vadd.f32 0.0, %v2084
      %2086 = vmatmul.f32.gmra.mxu0 %v1522
      %v2087 = vpop.f32.mrf.mxu0
      %v2088 = vadd.f32 0.0, %v2087
      %2089 = vmatmul.f32.gmra.mxu0 %v1978
      %v2090 = vpop.f32.mrf.mxu0
      %v2091 = vadd.f32 0.0, %v2090
      %2092 = vmatmul.f32.gmra.mxu0 %v1981
      %v2093 = vpop.f32.mrf.mxu0
      %v2094 = vadd.f32 0.0, %v2093
      %2095 = vdwg.mxu0
      %v2096 = vadd.f32 %v1943, %v2001
      %v2097 = vadd.f32 %v1944, %v2004
      %v2098 = vadd.f32 %v1945, %v2007
      %v2099 = vadd.f32 %v1946, %v2010
      %v2100 = vadd.f32 %v1947, %v2013
      %v2101 = vadd.f32 %v1948, %v2016
      %v2102 = vadd.f32 %v1949, %v2019
      %v2103 = vadd.f32 %v1950, %v2022
      %v2104 = vadd.f32 %v1951, %v2025
      %v2105 = vadd.f32 %v1952, %v2028
      %v2106 = vadd.f32 %v1953, %v2031
      %v2107 = vadd.f32 %v1954, %v2034
      %v2108 = vadd.f32 %v1955, %v2037
      %v2109 = vadd.f32 %v1956, %v2040
      %v2110 = vadd.f32 %v1957, %v2043
      %v2111 = vadd.f32 %v1958, %v2046
      %v2112 = vadd.f32 %v1959, %v2049
      %v2113 = vadd.f32 %v1960, %v2052
      %v2114 = vadd.f32 %v1961, %v2055
      %v2115 = vadd.f32 %v1962, %v2058
      %v2116 = vadd.f32 %v1963, %v2061
      %v2117 = vadd.f32 %v1964, %v2064
      %v2118 = vadd.f32 %v1965, %v2067
      %v2119 = vadd.f32 %v1966, %v2070
      %v2120 = vadd.f32 %v1967, %v2073
      %v2121 = vadd.f32 %v1968, %v2076
      %v2122 = vadd.f32 %v1969, %v2079
      %v2123 = vadd.f32 %v1970, %v2082
      %v2124 = vadd.f32 %v1971, %v2085
      %v2125 = vadd.f32 %v1972, %v2088
      %v2126 = vadd.f32 %v1973, %v2091
      %v2127 = vadd.f32 %v1974, %v2094
      %s2128 = scalar_lea.vmem %s3, 56
      %v2129 = vld [vmem:[%s2128] sm:$0xff]
      %v2131 = vsel %vm550, %v620, 0
      %v2134 = vsel %vm550, %v621, 0
      %2136 = vmatpush.msra.mxu0 0.0
      %2137 = vmatpush.msra.mxu0 0.0
      %2138 = vmatpush.msra.mxu0 0.0
      %2139 = vmatpush.msra.mxu0 0.0
      %2140 = vmatpush.msra.mxu0 0.0
      %2141 = vmatpush.msra.mxu0 0.0
      %2142 = vmatpush.msra.mxu0 0.0
      %2143 = vmatpush.msra.mxu0 0.0
      %2144 = vmatpush.msra.mxu0 0.0
      %2145 = vmatpush.msra.mxu0 0.0
      %2146 = vmatpush.msra.mxu0 0.0
      %2147 = vmatpush.msra.mxu0 0.0
      %2148 = vmatpush.msra.mxu0 0.0
      %2149 = vmatpush.msra.mxu0 0.0
      %2150 = vmatpush.msra.mxu0 0.0
      %2151 = vmatpush.msra.mxu0 %v2129
      %2152 = vmatmul.f32.gmra.mxu0 %v868
      %v2153 = vpop.f32.mrf.mxu0
      %v2154 = vadd.f32 0.0, %v2153
      %2155 = vmatmul.f32.gmra.mxu0 %v871
      %v2156 = vpop.f32.mrf.mxu0
      %v2157 = vadd.f32 0.0, %v2156
      %2158 = vmatmul.f32.gmra.mxu0 %v874
      %v2159 = vpop.f32.mrf.mxu0
      %v2160 = vadd.f32 0.0, %v2159
      %2161 = vmatmul.f32.gmra.mxu0 %v877
      %v2162 = vpop.f32.mrf.mxu0
      %v2163 = vadd.f32 0.0, %v2162
      %2164 = vmatmul.f32.gmra.mxu0 %v880
      %v2165 = vpop.f32.mrf.mxu0
      %v2166 = vadd.f32 0.0, %v2165
      %2167 = vmatmul.f32.gmra.mxu0 %v883
      %v2168 = vpop.f32.mrf.mxu0
      %v2169 = vadd.f32 0.0, %v2168
      %2170 = vmatmul.f32.gmra.mxu0 %v886
      %v2171 = vpop.f32.mrf.mxu0
      %v2172 = vadd.f32 0.0, %v2171
      %2173 = vmatmul.f32.gmra.mxu0 %v889
      %v2174 = vpop.f32.mrf.mxu0
      %v2175 = vadd.f32 0.0, %v2174
      %2176 = vmatmul.f32.gmra.mxu0 %v892
      %v2177 = vpop.f32.mrf.mxu0
      %v2178 = vadd.f32 0.0, %v2177
      %2179 = vmatmul.f32.gmra.mxu0 %v895
      %v2180 = vpop.f32.mrf.mxu0
      %v2181 = vadd.f32 0.0, %v2180
      %2182 = vmatmul.f32.gmra.mxu0 %v898
      %v2183 = vpop.f32.mrf.mxu0
      %v2184 = vadd.f32 0.0, %v2183
      %2185 = vmatmul.f32.gmra.mxu0 %v901
      %v2186 = vpop.f32.mrf.mxu0
      %v2187 = vadd.f32 0.0, %v2186
      %2188 = vmatmul.f32.gmra.mxu0 %v904
      %v2189 = vpop.f32.mrf.mxu0
      %v2190 = vadd.f32 0.0, %v2189
      %2191 = vmatmul.f32.gmra.mxu0 %v907
      %v2192 = vpop.f32.mrf.mxu0
      %v2193 = vadd.f32 0.0, %v2192
      %2194 = vmatmul.f32.gmra.mxu0 %v910
      %v2195 = vpop.f32.mrf.mxu0
      %v2196 = vadd.f32 0.0, %v2195
      %2197 = vmatmul.f32.gmra.mxu0 %v913
      %v2198 = vpop.f32.mrf.mxu0
      %v2199 = vadd.f32 0.0, %v2198
      %2200 = vmatmul.f32.gmra.mxu0 %v916
      %v2201 = vpop.f32.mrf.mxu0
      %v2202 = vadd.f32 0.0, %v2201
      %2203 = vmatmul.f32.gmra.mxu0 %v919
      %v2204 = vpop.f32.mrf.mxu0
      %v2205 = vadd.f32 0.0, %v2204
      %2206 = vmatmul.f32.gmra.mxu0 %v922
      %v2207 = vpop.f32.mrf.mxu0
      %v2208 = vadd.f32 0.0, %v2207
      %2209 = vmatmul.f32.gmra.mxu0 %v925
      %v2210 = vpop.f32.mrf.mxu0
      %v2211 = vadd.f32 0.0, %v2210
      %2212 = vmatmul.f32.gmra.mxu0 %v928
      %v2213 = vpop.f32.mrf.mxu0
      %v2214 = vadd.f32 0.0, %v2213
      %2215 = vmatmul.f32.gmra.mxu0 %v931
      %v2216 = vpop.f32.mrf.mxu0
      %v2217 = vadd.f32 0.0, %v2216
      %2218 = vmatmul.f32.gmra.mxu0 %v934
      %v2219 = vpop.f32.mrf.mxu0
      %v2220 = vadd.f32 0.0, %v2219
      %2221 = vmatmul.f32.gmra.mxu0 %v937
      %v2222 = vpop.f32.mrf.mxu0
      %v2223 = vadd.f32 0.0, %v2222
      %2224 = vmatmul.f32.gmra.mxu0 %v940
      %v2225 = vpop.f32.mrf.mxu0
      %v2226 = vadd.f32 0.0, %v2225
      %2227 = vmatmul.f32.gmra.mxu0 %v943
      %v2228 = vpop.f32.mrf.mxu0
      %v2229 = vadd.f32 0.0, %v2228
      %2230 = vmatmul.f32.gmra.mxu0 %v946
      %v2231 = vpop.f32.mrf.mxu0
      %v2232 = vadd.f32 0.0, %v2231
      %2233 = vmatmul.f32.gmra.mxu0 %v949
      %v2234 = vpop.f32.mrf.mxu0
      %v2235 = vadd.f32 0.0, %v2234
      %2236 = vmatmul.f32.gmra.mxu0 %v1672
      %v2237 = vpop.f32.mrf.mxu0
      %v2238 = vadd.f32 0.0, %v2237
      %2239 = vmatmul.f32.gmra.mxu0 %v1675
      %v2240 = vpop.f32.mrf.mxu0
      %v2241 = vadd.f32 0.0, %v2240
      %2242 = vmatmul.f32.gmra.mxu0 %v2131
      %v2243 = vpop.f32.mrf.mxu0
      %v2244 = vadd.f32 0.0, %v2243
      %2245 = vmatmul.f32.gmra.mxu0 %v2134
      %v2246 = vpop.f32.mrf.mxu0
      %v2247 = vadd.f32 0.0, %v2246
      %2248 = vdwg.mxu0
      %v2249 = vadd.f32 %v2096, %v2154
      %v2250 = vadd.f32 %v2097, %v2157
      %v2251 = vadd.f32 %v2098, %v2160
      %v2252 = vadd.f32 %v2099, %v2163
      %v2253 = vadd.f32 %v2100, %v2166
      %v2254 = vadd.f32 %v2101, %v2169
      %v2255 = vadd.f32 %v2102, %v2172
      %v2256 = vadd.f32 %v2103, %v2175
      %v2257 = vadd.f32 %v2104, %v2178
      %v2258 = vadd.f32 %v2105, %v2181
      %v2259 = vadd.f32 %v2106, %v2184
      %v2260 = vadd.f32 %v2107, %v2187
      %v2261 = vadd.f32 %v2108, %v2190
      %v2262 = vadd.f32 %v2109, %v2193
      %v2263 = vadd.f32 %v2110, %v2196
      %v2264 = vadd.f32 %v2111, %v2199
      %v2265 = vadd.f32 %v2112, %v2202
      %v2266 = vadd.f32 %v2113, %v2205
      %v2267 = vadd.f32 %v2114, %v2208
      %v2268 = vadd.f32 %v2115, %v2211
      %v2269 = vadd.f32 %v2116, %v2214
      %v2270 = vadd.f32 %v2117, %v2217
      %v2271 = vadd.f32 %v2118, %v2220
      %v2272 = vadd.f32 %v2119, %v2223
      %v2273 = vadd.f32 %v2120, %v2226
      %v2274 = vadd.f32 %v2121, %v2229
      %v2275 = vadd.f32 %v2122, %v2232
      %v2276 = vadd.f32 %v2123, %v2235
      %v2277 = vadd.f32 %v2124, %v2238
      %v2278 = vadd.f32 %v2125, %v2241
      %v2279 = vadd.f32 %v2126, %v2244
      %v2280 = vadd.f32 %v2127, %v2247
      %s2281 = scalar_lea.vmem %s3, 64
      %v2282 = vld [vmem:[%s2281] sm:$0xff]
      %v2284 = vsel %vm550, %v850, 0
      %v2287 = vsel %vm550, %v851, 0
      %2289 = vmatpush.msra.mxu0 0.0
      %2290 = vmatpush.msra.mxu0 0.0
      %2291 = vmatpush.msra.mxu0 0.0
      %2292 = vmatpush.msra.mxu0 0.0
      %2293 = vmatpush.msra.mxu0 0.0
      %2294 = vmatpush.msra.mxu0 0.0
      %2295 = vmatpush.msra.mxu0 0.0
      %2296 = vmatpush.msra.mxu0 0.0
      %2297 = vmatpush.msra.mxu0 0.0
      %2298 = vmatpush.msra.mxu0 0.0
      %2299 = vmatpush.msra.mxu0 0.0
      %2300 = vmatpush.msra.mxu0 0.0
      %2301 = vmatpush.msra.mxu0 0.0
      %2302 = vmatpush.msra.mxu0 0.0
      %2303 = vmatpush.msra.mxu0 0.0
      %2304 = vmatpush.msra.mxu0 %v2282
      %2305 = vmatmul.f32.gmra.mxu0 %v1288
      %v2306 = vpop.f32.mrf.mxu0
      %v2307 = vadd.f32 0.0, %v2306
      %2308 = vmatmul.f32.gmra.mxu0 %v1291
      %v2309 = vpop.f32.mrf.mxu0
      %v2310 = vadd.f32 0.0, %v2309
      %2311 = vmatmul.f32.gmra.mxu0 %v1294
      %v2312 = vpop.f32.mrf.mxu0
      %v2313 = vadd.f32 0.0, %v2312
      %2314 = vmatmul.f32.gmra.mxu0 %v1297
      %v2315 = vpop.f32.mrf.mxu0
      %v2316 = vadd.f32 0.0, %v2315
      %2317 = vmatmul.f32.gmra.mxu0 %v1300
      %v2318 = vpop.f32.mrf.mxu0
      %v2319 = vadd.f32 0.0, %v2318
      %2320 = vmatmul.f32.gmra.mxu0 %v1303
      %v2321 = vpop.f32.mrf.mxu0
      %v2322 = vadd.f32 0.0, %v2321
      %2323 = vmatmul.f32.gmra.mxu0 %v1306
      %v2324 = vpop.f32.mrf.mxu0
      %v2325 = vadd.f32 0.0, %v2324
      %2326 = vmatmul.f32.gmra.mxu0 %v1309
      %v2327 = vpop.f32.mrf.mxu0
      %v2328 = vadd.f32 0.0, %v2327
      %2329 = vmatmul.f32.gmra.mxu0 %v1312
      %v2330 = vpop.f32.mrf.mxu0
      %v2331 = vadd.f32 0.0, %v2330
      %2332 = vmatmul.f32.gmra.mxu0 %v1315
      %v2333 = vpop.f32.mrf.mxu0
      %v2334 = vadd.f32 0.0, %v2333
      %2335 = vmatmul.f32.gmra.mxu0 %v1318
      %v2336 = vpop.f32.mrf.mxu0
      %v2337 = vadd.f32 0.0, %v2336
      %2338 = vmatmul.f32.gmra.mxu0 %v1321
      %v2339 = vpop.f32.mrf.mxu0
      %v2340 = vadd.f32 0.0, %v2339
      %2341 = vmatmul.f32.gmra.mxu0 %v1324
      %v2342 = vpop.f32.mrf.mxu0
      %v2343 = vadd.f32 0.0, %v2342
      %2344 = vmatmul.f32.gmra.mxu0 %v1327
      %v2345 = vpop.f32.mrf.mxu0
      %v2346 = vadd.f32 0.0, %v2345
      %2347 = vmatmul.f32.gmra.mxu0 %v1330
      %v2348 = vpop.f32.mrf.mxu0
      %v2349 = vadd.f32 0.0, %v2348
      %2350 = vmatmul.f32.gmra.mxu0 %v1333
      %v2351 = vpop.f32.mrf.mxu0
      %v2352 = vadd.f32 0.0, %v2351
      %2353 = vmatmul.f32.gmra.mxu0 %v1336
      %v2354 = vpop.f32.mrf.mxu0
      %v2355 = vadd.f32 0.0, %v2354
      %2356 = vmatmul.f32.gmra.mxu0 %v1339
      %v2357 = vpop.f32.mrf.mxu0
      %v2358 = vadd.f32 0.0, %v2357
      %2359 = vmatmul.f32.gmra.mxu0 %v1342
      %v2360 = vpop.f32.mrf.mxu0
      %v2361 = vadd.f32 0.0, %v2360
      %2362 = vmatmul.f32.gmra.mxu0 %v1345
      %v2363 = vpop.f32.mrf.mxu0
      %v2364 = vadd.f32 0.0, %v2363
      %2365 = vmatmul.f32.gmra.mxu0 %v1348
      %v2366 = vpop.f32.mrf.mxu0
      %v2367 = vadd.f32 0.0, %v2366
      %2368 = vmatmul.f32.gmra.mxu0 %v1351
      %v2369 = vpop.f32.mrf.mxu0
      %v2370 = vadd.f32 0.0, %v2369
      %2371 = vmatmul.f32.gmra.mxu0 %v1354
      %v2372 = vpop.f32.mrf.mxu0
      %v2373 = vadd.f32 0.0, %v2372
      %2374 = vmatmul.f32.gmra.mxu0 %v1357
      %v2375 = vpop.f32.mrf.mxu0
      %v2376 = vadd.f32 0.0, %v2375
      %2377 = vmatmul.f32.gmra.mxu0 %v1360
      %v2378 = vpop.f32.mrf.mxu0
      %v2379 = vadd.f32 0.0, %v2378
      %2380 = vmatmul.f32.gmra.mxu0 %v1363
      %v2381 = vpop.f32.mrf.mxu0
      %v2382 = vadd.f32 0.0, %v2381
      %2383 = vmatmul.f32.gmra.mxu0 %v1366
      %v2384 = vpop.f32.mrf.mxu0
      %v2385 = vadd.f32 0.0, %v2384
      %2386 = vmatmul.f32.gmra.mxu0 %v1369
      %v2387 = vpop.f32.mrf.mxu0
      %v2388 = vadd.f32 0.0, %v2387
      %2389 = vmatmul.f32.gmra.mxu0 %v1825
      %v2390 = vpop.f32.mrf.mxu0
      %v2391 = vadd.f32 0.0, %v2390
      %2392 = vmatmul.f32.gmra.mxu0 %v1828
      %v2393 = vpop.f32.mrf.mxu0
      %v2394 = vadd.f32 0.0, %v2393
      %2395 = vmatmul.f32.gmra.mxu0 %v2284
      %v2396 = vpop.f32.mrf.mxu0
      %v2397 = vadd.f32 0.0, %v2396
      %2398 = vmatmul.f32.gmra.mxu0 %v2287
      %v2399 = vpop.f32.mrf.mxu0
      %v2400 = vadd.f32 0.0, %v2399
      %2401 = vdwg.mxu0
      %v2402 = vadd.f32 %v2249, %v2307
      %v2403 = vadd.f32 %v2250, %v2310
      %v2404 = vadd.f32 %v2251, %v2313
      %v2405 = vadd.f32 %v2252, %v2316
      %v2406 = vadd.f32 %v2253, %v2319
      %v2407 = vadd.f32 %v2254, %v2322
      %v2408 = vadd.f32 %v2255, %v2325
      %v2409 = vadd.f32 %v2256, %v2328
      %v2410 = vadd.f32 %v2257, %v2331
      %v2411 = vadd.f32 %v2258, %v2334
      %v2412 = vadd.f32 %v2259, %v2337
      %v2413 = vadd.f32 %v2260, %v2340
      %v2414 = vadd.f32 %v2261, %v2343
      %v2415 = vadd.f32 %v2262, %v2346
      %v2416 = vadd.f32 %v2263, %v2349
      %v2417 = vadd.f32 %v2264, %v2352
      %v2418 = vadd.f32 %v2265, %v2355
      %v2419 = vadd.f32 %v2266, %v2358
      %v2420 = vadd.f32 %v2267, %v2361
      %v2421 = vadd.f32 %v2268, %v2364
      %v2422 = vadd.f32 %v2269, %v2367
      %v2423 = vadd.f32 %v2270, %v2370
      %v2424 = vadd.f32 %v2271, %v2373
      %v2425 = vadd.f32 %v2272, %v2376
      %v2426 = vadd.f32 %v2273, %v2379
      %v2427 = vadd.f32 %v2274, %v2382
      %v2428 = vadd.f32 %v2275, %v2385
      %v2429 = vadd.f32 %v2276, %v2388
      %v2430 = vadd.f32 %v2277, %v2391
      %v2431 = vadd.f32 %v2278, %v2394
      %v2432 = vadd.f32 %v2279, %v2397
      %v2433 = vadd.f32 %v2280, %v2400
      %v2434 = vld [vmem:[%s4] sm:$0x1]
      %v2436 = vperm.slane %v2434, 0
      %v2438 = vadd.f32 %v2402, %v2436
      %v2439 = vadd.f32 %v2403, %v2436
      %v2440 = vadd.f32 %v2404, %v2436
      %v2441 = vadd.f32 %v2405, %v2436
      %v2442 = vadd.f32 %v2406, %v2436
      %v2443 = vadd.f32 %v2407, %v2436
      %v2444 = vadd.f32 %v2408, %v2436
      %v2445 = vadd.f32 %v2409, %v2436
      %v2446 = vadd.f32 %v2410, %v2436
      %v2447 = vadd.f32 %v2411, %v2436
      %v2448 = vadd.f32 %v2412, %v2436
      %v2449 = vadd.f32 %v2413, %v2436
      %v2450 = vadd.f32 %v2414, %v2436
      %v2451 = vadd.f32 %v2415, %v2436
      %v2452 = vadd.f32 %v2416, %v2436
      %v2453 = vadd.f32 %v2417, %v2436
      %v2454 = vadd.f32 %v2418, %v2436
      %v2455 = vadd.f32 %v2419, %v2436
      %v2456 = vadd.f32 %v2420, %v2436
      %v2457 = vadd.f32 %v2421, %v2436
      %v2458 = vadd.f32 %v2422, %v2436
      %v2459 = vadd.f32 %v2423, %v2436
      %v2460 = vadd.f32 %v2424, %v2436
      %v2461 = vadd.f32 %v2425, %v2436
      %v2462 = vadd.f32 %v2426, %v2436
      %v2463 = vadd.f32 %v2427, %v2436
      %v2464 = vadd.f32 %v2428, %v2436
      %v2465 = vadd.f32 %v2429, %v2436
      %v2466 = vadd.f32 %v2430, %v2436
      %v2467 = vadd.f32 %v2431, %v2436
      %v2468 = vadd.f32 %v2432, %v2436
      %v2469 = vadd.f32 %v2433, %v2436
      %v2470 = vmax.f32 %v2438, 0.0
      %v2471 = vmax.f32 %v2439, 0.0
      %v2472 = vmax.f32 %v2440, 0.0
      %v2473 = vmax.f32 %v2441, 0.0
      %v2474 = vmax.f32 %v2442, 0.0
      %v2475 = vmax.f32 %v2443, 0.0
      %v2476 = vmax.f32 %v2444, 0.0
      %v2477 = vmax.f32 %v2445, 0.0
      %v2478 = vmax.f32 %v2446, 0.0
      %v2479 = vmax.f32 %v2447, 0.0
      %v2480 = vmax.f32 %v2448, 0.0
      %v2481 = vmax.f32 %v2449, 0.0
      %v2482 = vmax.f32 %v2450, 0.0
      %v2483 = vmax.f32 %v2451, 0.0
      %v2484 = vmax.f32 %v2452, 0.0
      %v2485 = vmax.f32 %v2453, 0.0
      %v2486 = vmax.f32 %v2454, 0.0
      %v2487 = vmax.f32 %v2455, 0.0
      %v2488 = vmax.f32 %v2456, 0.0
      %v2489 = vmax.f32 %v2457, 0.0
      %v2490 = vmax.f32 %v2458, 0.0
      %v2491 = vmax.f32 %v2459, 0.0
      %v2492 = vmax.f32 %v2460, 0.0
      %v2493 = vmax.f32 %v2461, 0.0
      %v2494 = vmax.f32 %v2462, 0.0
      %v2495 = vmax.f32 %v2463, 0.0
      %v2496 = vmax.f32 %v2464, 0.0
      %v2497 = vmax.f32 %v2465, 0.0
      %v2498 = vmax.f32 %v2466, 0.0
      %v2499 = vmax.f32 %v2467, 0.0
      %v2500 = vmax.f32 %v2468, 0.0
      %v2501 = vmax.f32 %v2469, 0.0
      %vm2502 = vcmask 130048
      %2503 = vst.msk [vmem:[%s224] sm:$0xff] %vm2502, %v2470
      %2504 = vst.msk [vmem:[%s224 + $0x8] sm:$0xff] %vm2502, %v2471
      %2505 = vst.msk [vmem:[%s224 + $0x10] sm:$0xff] %vm2502, %v2472
      %2506 = vst.msk [vmem:[%s224 + $0x18] sm:$0xff] %vm2502, %v2473
      %2507 = vst.msk [vmem:[%s224 + $0x20] sm:$0xff] %vm2502, %v2474
      %2508 = vst.msk [vmem:[%s224 + $0x28] sm:$0xff] %vm2502, %v2475
      %2509 = vst.msk [vmem:[%s224 + $0x30] sm:$0xff] %vm2502, %v2476
      %2510 = vst.msk [vmem:[%s224 + $0x38] sm:$0xff] %vm2502, %v2477
      %2511 = vst.msk [vmem:[%s224 + $0x40] sm:$0xff] %vm2502, %v2478
      %2512 = vst.msk [vmem:[%s224 + $0x48] sm:$0xff] %vm2502, %v2479
      %2513 = vst.msk [vmem:[%s224 + $0x50] sm:$0xff] %vm2502, %v2480
      %2514 = vst.msk [vmem:[%s224 + $0x58] sm:$0xff] %vm2502, %v2481
      %2515 = vst.msk [vmem:[%s224 + $0x60] sm:$0xff] %vm2502, %v2482
      %2516 = vst.msk [vmem:[%s224 + $0x68] sm:$0xff] %vm2502, %v2483
      %2517 = vst.msk [vmem:[%s224 + $0x70] sm:$0xff] %vm2502, %v2484
      %2518 = vst.msk [vmem:[%s224 + $0x78] sm:$0xff] %vm2502, %v2485
      %2519 = vst.msk [vmem:[%s224 + $0x80] sm:$0xff] %vm2502, %v2486
      %2520 = vst.msk [vmem:[%s224 + $0x88] sm:$0xff] %vm2502, %v2487
      %2521 = vst.msk [vmem:[%s224 + $0x90] sm:$0xff] %vm2502, %v2488
      %2522 = vst.msk [vmem:[%s224 + $0x98] sm:$0xff] %vm2502, %v2489
      %2523 = vst.msk [vmem:[%s224 + $0xa0] sm:$0xff] %vm2502, %v2490
      %2524 = vst.msk [vmem:[%s224 + $0xa8] sm:$0xff] %vm2502, %v2491
      %2525 = vst.msk [vmem:[%s224 + $0xb0] sm:$0xff] %vm2502, %v2492
      %2526 = vst.msk [vmem:[%s224 + $0xb8] sm:$0xff] %vm2502, %v2493
      %2527 = vst.msk [vmem:[%s224 + $0xc0] sm:$0xff] %vm2502, %v2494
      %2528 = vst.msk [vmem:[%s224 + $0xc8] sm:$0xff] %vm2502, %v2495
      %2529 = vst.msk [vmem:[%s224 + $0xd0] sm:$0xff] %vm2502, %v2496
      %2530 = vst.msk [vmem:[%s224 + $0xd8] sm:$0xff] %vm2502, %v2497
      %2531 = vst.msk [vmem:[%s224 + $0xe0] sm:$0xff] %vm2502, %v2498
      %2532 = vst.msk [vmem:[%s224 + $0xe8] sm:$0xff] %vm2502, %v2499
      %2533 = vst.msk [vmem:[%s224 + $0xf0] sm:$0xff] %vm2502, %v2500
      %2534 = vst.msk [vmem:[%s224 + $0xf8] sm:$0xff] %vm2502, %v2501
      %p2535 = scmp.lt.s32.totalorder %s16, 1
      %s2536 = scalar_select %p2535, %s16, 1
      %s2537 = smul.addr %s2536, 32
      %s2538 = smul.addr %s2537, 8
      %s2539 = scalar_lea.vmem %s5, %s2538
      // Predicated region
      $region45: #{fire_block_nchw.1} parent=39 // pred_check
        %p2540 = pneg %p144
      $region46: #{fire_block_nchw.1} parent=39 // pred_check_branch
        %2542 = sbr.rel (%p2540) target = $region48
      $region47: #{fire_block_nchw.1} parent=39 // pred_region
        _
      $region48: #{fire_block_nchw.1} parent=39 // pred_fallthru
        _
    $region40: #{fire_block_nchw.1} parent=5 // pred_fallthru
      _
    %p2543 = scmp.le.s32.totalorder 2, %s11
    // Predicated region
    $region49: #{fire_block_nchw.1} parent=5 // pred_check
      %p2544 = pneg %p2543
    $region50: #{fire_block_nchw.1} parent=5 // pred_check_branch
      %2546 = sbr.rel (%p2544) target = $region52
    $region51: #{fire_block_nchw.1} parent=5 // pred_region
      %s2547 = ssub.s32 %s11, 2
      // Predicated region
      $region53: #{fire_block_nchw.1} parent=51 // pred_check
        %p2548 = pneg %p150
      $region54: #{fire_block_nchw.1} parent=51 // pred_check_branch
        %2550 = sbr.rel (%p2548) target = $region56
      $region55: #{fire_block_nchw.1} parent=51 // pred_region
        %p2551 = scmp.lt.s32.totalorder %s17, 1
        %s2552 = scalar_select %p2551, %s17, 1
        %s2553 = smul.addr %s2552, 32
        %s2554 = smul.addr %s2553, 8
        %s2555 = scalar_lea.vmem %s5, %s2554
      $region56: #{fire_block_nchw.1} parent=51 // pred_fallthru
        _
    $region52: #{fire_block_nchw.1} parent=5 // pred_fallthru
      _
  $region6: #{fire_block_nchw.1} parent=0 // loop_footer
    %s15 = sadd.s32 1, %s11
  $region7: #{fire_block_nchw.1} parent=0 // loop_footer_branch
    %10 = sbr.rel target = $region3
  $region8: #{fire_block_nchw.1} parent=0 // loop_exit
    _

</llo_original>
